<compile_context>
chip_gen: v6e
topology: v6e:2x2x1
jax: 0.10.0
libtpu: 0.0.40
codegen_flags: <defaults>
</compile_context>

<pallas_src>
import functools

import jax
import jax.numpy as jnp
import numpy as np
from jax.experimental import pallas as pl
from jax.experimental.pallas import tpu as pltpu

_NUM_GROUPS = 6
_MAX_BATCH_UNROLL = 8          # batch elements per grid step (the inner loop is unrolled)
_TILE_VMEM_BUDGET = 6 << 20    # bytes for one step's x+out tiles (x2 for double buffering)


def _attention_kernel(x_ref, w1_ref, w2_ref, pool_ref, out_ref, gate_ref):
    """One TB-sized batch block per grid step.  All refs live in VMEM.

    x_ref    : (TB, C, HWp)  input tile (NCHW, spatial flattened + lane-padded to 128)
    w1_ref   : (C//r, C)     first Linear weight (PyTorch layout), fetched once
    w2_ref   : (C, C//r)     second Linear weight (PyTorch layout), fetched once
    pool_ref : (HWp, 1)      1/HW in the first HW rows, 0 in the padded rows
    out_ref  : (TB, C, HWp)  x * sigmoid(MLP(avgpool(x)))
    gate_ref : (TB, C, 1)    raw sigmoid gate (f32) for the wrapper-side group statistics
    """
    tb = x_ref.shape[0]
    w1 = w1_ref[...]          # hoisted out of the unrolled loop
    w2 = w2_ref[...]
    pool = pool_ref[...]

    # Static unroll over the batch elements of this block.  Each iteration is the proven
    # column-form SE path: channels stay on sublanes end-to-end, the gate is born as a
    # (C, 1) column, and the scale is a lane broadcast -- no relayouts.  The matvecs are
    # tiny (kernel is HBM-bound) and fully hidden under the tile DMAs.
    for bi in range(tb):
        xb = x_ref[bi]                                                         # (C, HWp)
        # squeeze: global average pool as an MXU matvec (padded lanes hit 0 in `pool`)
        y = jnp.dot(xb, pool, preferred_element_type=jnp.float32)              # (C, 1)
        # excitation: Linear -> ReLU -> Linear -> Sigmoid, weights in PyTorch layout
        h = jnp.maximum(jnp.dot(w1, y, preferred_element_type=jnp.float32), 0.0)
        g = jax.nn.sigmoid(jnp.dot(w2, h, preferred_element_type=jnp.float32))  # (C, 1)
        gate_ref[bi] = g                                       # tiny (C,1) side output
        # scale: lane-broadcast multiply, full-width (unmasked) store
        out_ref[bi] = (xb * g).astype(out_ref.dtype)


@functools.lru_cache(maxsize=None)
def _pool_vector(hw, hwp):
    """(HWp, 1) column holding 1/HW in the valid rows and 0 in the padding rows."""
    v = np.zeros((hwp, 1), dtype=np.float32)
    v[:hw, 0] = 1.0 / hw
    return jnp.asarray(v)


def _choose_batch_tile(b, c, hwp, in_bytes, out_bytes):
    """Batch elements per grid step, derived from a VMEM budget that is safe on v5e/v6e/v7x."""
    per_elem = c * hwp * (in_bytes + out_bytes)          # x + out bytes per batch element
    tb = int(max(1, min(b, _TILE_VMEM_BUDGET // per_elem, _MAX_BATCH_UNROLL)))
    # Keep >= 2 grid steps when possible: lets the in/out DMAs pipeline and lets v7x's two
    # TensorCores split the batch axis (dimension_semantics=("parallel",)).
    if b > 1 and pl.cdiv(b, tb) < 2:
        tb = int(pl.cdiv(b, 2))
    return tb


def attention_module(x, w1, w2, out_dtype=None):
    """x: (B, C, H, W).  w1: (C//ratio, C), w2: (C, C//ratio) -- PyTorch Linear layout.

    Returns (attention_out (B, C, H, W) in out_dtype (default x.dtype),
             stats (6,) f32 with stats[g] = sum(gate_g) - std(gate_g, unbiased)).
    Pass out_dtype=jnp.bfloat16 to halve the output HBM traffic (compute stays f32).
    """
    b, c, hh, ww = x.shape
    assert w1.shape[1] == c and w2.shape[0] == c and w1.shape[0] == w2.shape[1], \
        "w1/w2 must be (C//ratio, C) and (C, C//ratio) in PyTorch Linear layout"
    assert c // _NUM_GROUPS >= 1, "need at least 6 channels for the group statistics"
    out_dtype = jnp.dtype(x.dtype if out_dtype is None else out_dtype)

    hw = hh * ww
    hwp = int(pl.cdiv(hw, 128)) * 128    # lane-pad so the big stores are unmasked vst
    tb = _choose_batch_tile(b, c, hwp, jnp.dtype(x.dtype).itemsize, out_dtype.itemsize)
    grid = int(pl.cdiv(b, tb))
    b_pad = grid * tb

    x_flat = x.reshape(b, c, hw)
    if b_pad != b or hwp != hw:
        # zero-padding: padded HW lanes get 0 weight in the pool vector; padded batch rows
        # are sliced away from both outputs below, so they never touch the statistics.
        x_flat = jnp.pad(x_flat, ((0, b_pad - b), (0, 0), (0, hwp - hw)))
    pool = _pool_vector(hw, hwp)

    # VMEM: 2 pipeline buffers for each of x/out/gate plus the (tiny) once-fetched weights.
    # The budget above keeps this well under v5e's 16 MiB scoped default, but set the limit
    # explicitly so larger C*HW shapes (tb shrinks toward 1) still compile on all generations.
    tile_bytes = tb * c * hwp * (jnp.dtype(x.dtype).itemsize + out_dtype.itemsize)
    aux_bytes = tb * c * 4 + (w1.size + w2.size + hwp) * 4
    vmem_limit = int(max(32 << 20, 2 * (tile_bytes + aux_bytes) + (4 << 20)))

    out_flat, gates = pl.pallas_call(
        _attention_kernel,
        grid=(grid,),
        out_shape=(
            jax.ShapeDtypeStruct((b_pad, c, hwp), out_dtype),
            jax.ShapeDtypeStruct((b_pad, c, 1), jnp.float32),
        ),
        in_specs=[
            pl.BlockSpec((tb, c, hwp), lambda i: (i, 0, 0)),     # x: TB batch elems / step
            pl.BlockSpec((w1.shape[0], c), lambda i: (0, 0)),    # w1: constant block -> fetched once
            pl.BlockSpec((c, w2.shape[1]), lambda i: (0, 0)),    # w2
            pl.BlockSpec((hwp, 1), lambda i: (0, 0)),            # pool column (1/HW, lane-padded)
        ],
        out_specs=(
            pl.BlockSpec((tb, c, hwp), lambda i: (i, 0, 0)),
            pl.BlockSpec((tb, c, 1), lambda i: (i, 0, 0)),
        ),
        compiler_params=pltpu.CompilerParams(
            dimension_semantics=("parallel",),   # batch blocks are independent (megacore on v7x)
            vmem_limit_bytes=vmem_limit,
        ),
    )(x_flat, w1, w2, pool)

    if b_pad != b or hwp != hw:
        out_flat = out_flat[:b, :, :hw]
    attention_out = out_flat.reshape(b, c, hh, ww)

    # Per-group statistics from the raw gate (B*C floats -- negligible), computed with a
    # two-pass unbiased std exactly like torch.std (ddof=1).  Note: B * (C//6) == 1 divides
    # by zero and yields NaN, matching PyTorch's behavior.
    y = gates[:b, :, 0]                                      # (B, C) f32
    op_channel = c // _NUM_GROUPS
    stats = []
    for g in range(_NUM_GROUPS):
        t = y[:, g * op_channel:(g + 1) * op_channel]
        stats.append(jnp.sum(t) - jnp.std(t, ddof=1))
    return attention_out, jnp.stack(stats)


def _reference(x, w1, w2):
    """Pure-JAX mirror of the PyTorch forward, for the correctness check."""
    b, c, _, _ = x.shape
    y = jnp.mean(x, axis=(2, 3))                             # adaptive avg pool to 1x1
    h = jnp.maximum(y @ w1.T, 0.0)
    g = jax.nn.sigmoid(h @ w2.T)                             # (B, C)
    out = x * g[:, :, None, None]
    op = c // _NUM_GROUPS
    stats = [jnp.sum(g[:, i * op:(i + 1) * op]) - jnp.std(g[:, i * op:(i + 1) * op], ddof=1)
             for i in range(_NUM_GROUPS)]
    return out, jnp.stack(stats)


if __name__ == "__main__":
    # C divisible by ratio=16 and by 6; HW = 256 is already lane-dense (multiple of 128).
    B, C, H, W = 8, 96, 16, 16
    RATIO = 16
    CR = C // RATIO

    key = jax.random.PRNGKey(0)
    kx, k1, k2 = jax.random.split(key, 3)
    x = jax.random.normal(kx, (B, C, H, W), dtype=jnp.float32)
    bound1 = 1.0 / (C ** 0.5)
    bound2 = 1.0 / (CR ** 0.5)
    w1 = jax.random.uniform(k1, (CR, C), jnp.float32, -bound1, bound1)   # Linear(C -> C//r), no bias
    w2 = jax.random.uniform(k2, (C, CR), jnp.float32, -bound2, bound2)   # Linear(C//r -> C), no bias

    attn_fn = jax.jit(attention_module)
    attention_out, stats = attn_fn(x, w1, w2)
    jax.block_until_ready((attention_out, stats))

    # sanity check against a pure-JAX reference of the PyTorch forward
    ref_out, ref_stats = jax.jit(_reference)(x, w1, w2)
    jax.block_until_ready((ref_out, ref_stats))
    np.testing.assert_allclose(np.asarray(attention_out), np.asarray(ref_out), rtol=1e-4, atol=1e-4)
    np.testing.assert_allclose(np.asarray(stats), np.asarray(ref_stats), rtol=1e-4, atol=1e-3)

    op_attention = [float(v) for v in stats]   # mirror the PyTorch (tensor, list-of-float) return
    assert attention_out.shape == (B, C, H, W)
    assert len(op_attention) == _NUM_GROUPS

    print("KERNEL_OK")
</pallas_src>

<mosaic_0001>
module attributes {stable_mosaic.version = 11 : i64} {
  func.func @_attention_kernel(%arg0: i32, %arg1: memref<4x96x256xf32, #tpu.memory_space<vmem>>, %arg2: memref<6x96xf32, #tpu.memory_space<vmem>>, %arg3: memref<96x6xf32, #tpu.memory_space<vmem>>, %arg4: memref<256x1xf32, #tpu.memory_space<vmem>>, %arg5: memref<4x96x256xf32, #tpu.memory_space<vmem>>, %arg6: memref<4x96x1xf32, #tpu.memory_space<vmem>>) attributes {dimension_semantics = [#tpu.dimension_semantics<parallel>], iteration_bounds = array<i64: 2>, scalar_prefetch = 0 : i64, scratch_operands = 0 : i64, tpu.core_type = #tpu.core_type<tc>, window_params = [{transform_indices = @transform_0, window_bounds = array<i64: 4, 96, 256>}, {pipeline_mode = #tpu.pipeline_mode<synchronous>, transform_indices = @transform_1, window_bounds = array<i64: 6, 96>}, {pipeline_mode = #tpu.pipeline_mode<synchronous>, transform_indices = @transform_2, window_bounds = array<i64: 96, 6>}, {pipeline_mode = #tpu.pipeline_mode<synchronous>, transform_indices = @transform_3, window_bounds = array<i64: 256, 1>}, {transform_indices = @transform_4, window_bounds = array<i64: 4, 96, 256>}, {transform_indices = @transform_5, window_bounds = array<i64: 4, 96, 1>}]} {
    %c0 = arith.constant 0 : index
    %c0_0 = arith.constant 0 : index
    %0 = vector.load %arg2[%c0, %c0_0] : memref<6x96xf32, #tpu.memory_space<vmem>>, vector<6x96xf32>
    %c0_1 = arith.constant 0 : index
    %c0_2 = arith.constant 0 : index
    %1 = vector.load %arg3[%c0_1, %c0_2] : memref<96x6xf32, #tpu.memory_space<vmem>>, vector<96x6xf32>
    %c0_3 = arith.constant 0 : index
    %c0_4 = arith.constant 0 : index
    %2 = vector.load %arg4[%c0_3, %c0_4] : memref<256x1xf32, #tpu.memory_space<vmem>>, vector<256x1xf32>
    %c0_5 = arith.constant 0 : index
    %c0_6 = arith.constant 0 : index
    %c0_7 = arith.constant 0 : index
    %3 = vector.load %arg1[%c0_5, %c0_6, %c0_7] : memref<4x96x256xf32, #tpu.memory_space<vmem>>, vector<1x96x256xf32>
    %4 = vector.shape_cast %3 : vector<1x96x256xf32> to vector<96x256xf32>
    %cst = arith.constant dense<0.000000e+00> : vector<96x1xf32>
    %5 = tpu.matmul %4, %2, %cst {dimension_numbers = #tpu.dot_dimension_numbers<[1], [0], [0], [1], [0, 0, 1, 1], [], []>} : vector<96x256xf32>, vector<256x1xf32>, vector<96x1xf32> -> vector<96x1xf32>
    %cst_8 = arith.constant dense<0.000000e+00> : vector<6x1xf32>
    %6 = tpu.matmul %0, %5, %cst_8 {dimension_numbers = #tpu.dot_dimension_numbers<[1], [0], [0], [1], [0, 0, 1, 1], [], []>} : vector<6x96xf32>, vector<96x1xf32>, vector<6x1xf32> -> vector<6x1xf32>
    %cst_9 = arith.constant 0.000000e+00 : f32
    %7 = vector.broadcast %cst_9 : f32 to vector<6x1xf32>
    %8 = arith.maximumf %6, %7 : vector<6x1xf32>
    %cst_10 = arith.constant dense<0.000000e+00> : vector<96x1xf32>
    %9 = tpu.matmul %1, %8, %cst_10 {dimension_numbers = #tpu.dot_dimension_numbers<[1], [0], [0], [1], [0, 0, 1, 1], [], []>} : vector<96x6xf32>, vector<6x1xf32>, vector<96x1xf32> -> vector<96x1xf32>
    %10 = arith.negf %9 : vector<96x1xf32>
    %11 = math.exp %10 : vector<96x1xf32>
    %cst_11 = arith.constant 1.000000e+00 : f32
    %12 = vector.broadcast %cst_11 : f32 to vector<96x1xf32>
    %13 = arith.addf %12, %11 : vector<96x1xf32>
    %14 = arith.divf %12, %13 : vector<96x1xf32>
    %c0_12 = arith.constant 0 : index
    %c0_13 = arith.constant 0 : index
    %c0_14 = arith.constant 0 : index
    %15 = vector.load %arg6[%c0_12, %c0_13, %c0_14] : memref<4x96x1xf32, #tpu.memory_space<vmem>>, vector<1x96x1xf32>
    %16 = vector.shape_cast %15 : vector<1x96x1xf32> to vector<96x1xf32>
    %17 = vector.shape_cast %14 : vector<96x1xf32> to vector<1x96x1xf32>
    tpu.vector_store %arg6[%c0_12, %c0_13, %c0_14], %17 {strides = array<i32>} : memref<4x96x1xf32, #tpu.memory_space<vmem>>, vector<1x96x1xf32>,
    %18 = vector.broadcast %14 : vector<96x1xf32> to vector<96x256xf32>
    %19 = arith.mulf %4, %18 : vector<96x256xf32>
    %c0_15 = arith.constant 0 : index
    %c0_16 = arith.constant 0 : index
    %c0_17 = arith.constant 0 : index
    %20 = vector.load %arg5[%c0_15, %c0_16, %c0_17] : memref<4x96x256xf32, #tpu.memory_space<vmem>>, vector<1x96x256xf32>
    %21 = vector.shape_cast %20 : vector<1x96x256xf32> to vector<96x256xf32>
    %22 = vector.shape_cast %19 : vector<96x256xf32> to vector<1x96x256xf32>
    tpu.vector_store %arg5[%c0_15, %c0_16, %c0_17], %22 {strides = array<i32>} : memref<4x96x256xf32, #tpu.memory_space<vmem>>, vector<1x96x256xf32>,
    %c1 = arith.constant 1 : index
    %c0_18 = arith.constant 0 : index
    %c0_19 = arith.constant 0 : index
    %23 = vector.load %arg1[%c1, %c0_18, %c0_19] : memref<4x96x256xf32, #tpu.memory_space<vmem>>, vector<1x96x256xf32>
    %24 = vector.shape_cast %23 : vector<1x96x256xf32> to vector<96x256xf32>
    %cst_20 = arith.constant dense<0.000000e+00> : vector<96x1xf32>
    %25 = tpu.matmul %24, %2, %cst_20 {dimension_numbers = #tpu.dot_dimension_numbers<[1], [0], [0], [1], [0, 0, 1, 1], [], []>} : vector<96x256xf32>, vector<256x1xf32>, vector<96x1xf32> -> vector<96x1xf32>
    %cst_21 = arith.constant dense<0.000000e+00> : vector<6x1xf32>
    %26 = tpu.matmul %0, %25, %cst_21 {dimension_numbers = #tpu.dot_dimension_numbers<[1], [0], [0], [1], [0, 0, 1, 1], [], []>} : vector<6x96xf32>, vector<96x1xf32>, vector<6x1xf32> -> vector<6x1xf32>
    %cst_22 = arith.constant 0.000000e+00 : f32
    %27 = vector.broadcast %cst_22 : f32 to vector<6x1xf32>
    %28 = arith.maximumf %26, %27 : vector<6x1xf32>
    %cst_23 = arith.constant dense<0.000000e+00> : vector<96x1xf32>
    %29 = tpu.matmul %1, %28, %cst_23 {dimension_numbers = #tpu.dot_dimension_numbers<[1], [0], [0], [1], [0, 0, 1, 1], [], []>} : vector<96x6xf32>, vector<6x1xf32>, vector<96x1xf32> -> vector<96x1xf32>
    %30 = arith.negf %29 : vector<96x1xf32>
    %31 = math.exp %30 : vector<96x1xf32>
    %cst_24 = arith.constant 1.000000e+00 : f32
    %32 = vector.broadcast %cst_24 : f32 to vector<96x1xf32>
    %33 = arith.addf %32, %31 : vector<96x1xf32>
    %34 = arith.divf %32, %33 : vector<96x1xf32>
    %c1_25 = arith.constant 1 : index
    %c0_26 = arith.constant 0 : index
    %c0_27 = arith.constant 0 : index
    %35 = vector.load %arg6[%c1_25, %c0_26, %c0_27] : memref<4x96x1xf32, #tpu.memory_space<vmem>>, vector<1x96x1xf32>
    %36 = vector.shape_cast %35 : vector<1x96x1xf32> to vector<96x1xf32>
    %37 = vector.shape_cast %34 : vector<96x1xf32> to vector<1x96x1xf32>
    tpu.vector_store %arg6[%c1_25, %c0_26, %c0_27], %37 {strides = array<i32>} : memref<4x96x1xf32, #tpu.memory_space<vmem>>, vector<1x96x1xf32>,
    %38 = vector.broadcast %34 : vector<96x1xf32> to vector<96x256xf32>
    %39 = arith.mulf %24, %38 : vector<96x256xf32>
    %c1_28 = arith.constant 1 : index
    %c0_29 = arith.constant 0 : index
    %c0_30 = arith.constant 0 : index
    %40 = vector.load %arg5[%c1_28, %c0_29, %c0_30] : memref<4x96x256xf32, #tpu.memory_space<vmem>>, vector<1x96x256xf32>
    %41 = vector.shape_cast %40 : vector<1x96x256xf32> to vector<96x256xf32>
    %42 = vector.shape_cast %39 : vector<96x256xf32> to vector<1x96x256xf32>
    tpu.vector_store %arg5[%c1_28, %c0_29, %c0_30], %42 {strides = array<i32>} : memref<4x96x256xf32, #tpu.memory_space<vmem>>, vector<1x96x256xf32>,
    %c2 = arith.constant 2 : index
    %c0_31 = arith.constant 0 : index
    %c0_32 = arith.constant 0 : index
    %43 = vector.load %arg1[%c2, %c0_31, %c0_32] : memref<4x96x256xf32, #tpu.memory_space<vmem>>, vector<1x96x256xf32>
    %44 = vector.shape_cast %43 : vector<1x96x256xf32> to vector<96x256xf32>
    %cst_33 = arith.constant dense<0.000000e+00> : vector<96x1xf32>
    %45 = tpu.matmul %44, %2, %cst_33 {dimension_numbers = #tpu.dot_dimension_numbers<[1], [0], [0], [1], [0, 0, 1, 1], [], []>} : vector<96x256xf32>, vector<256x1xf32>, vector<96x1xf32> -> vector<96x1xf32>
    %cst_34 = arith.constant dense<0.000000e+00> : vector<6x1xf32>
    %46 = tpu.matmul %0, %45, %cst_34 {dimension_numbers = #tpu.dot_dimension_numbers<[1], [0], [0], [1], [0, 0, 1, 1], [], []>} : vector<6x96xf32>, vector<96x1xf32>, vector<6x1xf32> -> vector<6x1xf32>
    %cst_35 = arith.constant 0.000000e+00 : f32
    %47 = vector.broadcast %cst_35 : f32 to vector<6x1xf32>
    %48 = arith.maximumf %46, %47 : vector<6x1xf32>
    %cst_36 = arith.constant dense<0.000000e+00> : vector<96x1xf32>
    %49 = tpu.matmul %1, %48, %cst_36 {dimension_numbers = #tpu.dot_dimension_numbers<[1], [0], [0], [1], [0, 0, 1, 1], [], []>} : vector<96x6xf32>, vector<6x1xf32>, vector<96x1xf32> -> vector<96x1xf32>
    %50 = arith.negf %49 : vector<96x1xf32>
    %51 = math.exp %50 : vector<96x1xf32>
    %cst_37 = arith.constant 1.000000e+00 : f32
    %52 = vector.broadcast %cst_37 : f32 to vector<96x1xf32>
    %53 = arith.addf %52, %51 : vector<96x1xf32>
    %54 = arith.divf %52, %53 : vector<96x1xf32>
    %c2_38 = arith.constant 2 : index
    %c0_39 = arith.constant 0 : index
    %c0_40 = arith.constant 0 : index
    %55 = vector.load %arg6[%c2_38, %c0_39, %c0_40] : memref<4x96x1xf32, #tpu.memory_space<vmem>>, vector<1x96x1xf32>
    %56 = vector.shape_cast %55 : vector<1x96x1xf32> to vector<96x1xf32>
    %57 = vector.shape_cast %54 : vector<96x1xf32> to vector<1x96x1xf32>
    tpu.vector_store %arg6[%c2_38, %c0_39, %c0_40], %57 {strides = array<i32>} : memref<4x96x1xf32, #tpu.memory_space<vmem>>, vector<1x96x1xf32>,
    %58 = vector.broadcast %54 : vector<96x1xf32> to vector<96x256xf32>
    %59 = arith.mulf %44, %58 : vector<96x256xf32>
    %c2_41 = arith.constant 2 : index
    %c0_42 = arith.constant 0 : index
    %c0_43 = arith.constant 0 : index
    %60 = vector.load %arg5[%c2_41, %c0_42, %c0_43] : memref<4x96x256xf32, #tpu.memory_space<vmem>>, vector<1x96x256xf32>
    %61 = vector.shape_cast %60 : vector<1x96x256xf32> to vector<96x256xf32>
    %62 = vector.shape_cast %59 : vector<96x256xf32> to vector<1x96x256xf32>
    tpu.vector_store %arg5[%c2_41, %c0_42, %c0_43], %62 {strides = array<i32>} : memref<4x96x256xf32, #tpu.memory_space<vmem>>, vector<1x96x256xf32>,
    %c3 = arith.constant 3 : index
    %c0_44 = arith.constant 0 : index
    %c0_45 = arith.constant 0 : index
    %63 = vector.load %arg1[%c3, %c0_44, %c0_45] : memref<4x96x256xf32, #tpu.memory_space<vmem>>, vector<1x96x256xf32>
    %64 = vector.shape_cast %63 : vector<1x96x256xf32> to vector<96x256xf32>
    %cst_46 = arith.constant dense<0.000000e+00> : vector<96x1xf32>
    %65 = tpu.matmul %64, %2, %cst_46 {dimension_numbers = #tpu.dot_dimension_numbers<[1], [0], [0], [1], [0, 0, 1, 1], [], []>} : vector<96x256xf32>, vector<256x1xf32>, vector<96x1xf32> -> vector<96x1xf32>
    %cst_47 = arith.constant dense<0.000000e+00> : vector<6x1xf32>
    %66 = tpu.matmul %0, %65, %cst_47 {dimension_numbers = #tpu.dot_dimension_numbers<[1], [0], [0], [1], [0, 0, 1, 1], [], []>} : vector<6x96xf32>, vector<96x1xf32>, vector<6x1xf32> -> vector<6x1xf32>
    %cst_48 = arith.constant 0.000000e+00 : f32
    %67 = vector.broadcast %cst_48 : f32 to vector<6x1xf32>
    %68 = arith.maximumf %66, %67 : vector<6x1xf32>
    %cst_49 = arith.constant dense<0.000000e+00> : vector<96x1xf32>
    %69 = tpu.matmul %1, %68, %cst_49 {dimension_numbers = #tpu.dot_dimension_numbers<[1], [0], [0], [1], [0, 0, 1, 1], [], []>} : vector<96x6xf32>, vector<6x1xf32>, vector<96x1xf32> -> vector<96x1xf32>
    %70 = arith.negf %69 : vector<96x1xf32>
    %71 = math.exp %70 : vector<96x1xf32>
    %cst_50 = arith.constant 1.000000e+00 : f32
    %72 = vector.broadcast %cst_50 : f32 to vector<96x1xf32>
    %73 = arith.addf %72, %71 : vector<96x1xf32>
    %74 = arith.divf %72, %73 : vector<96x1xf32>
    %c3_51 = arith.constant 3 : index
    %c0_52 = arith.constant 0 : index
    %c0_53 = arith.constant 0 : index
    %75 = vector.load %arg6[%c3_51, %c0_52, %c0_53] : memref<4x96x1xf32, #tpu.memory_space<vmem>>, vector<1x96x1xf32>
    %76 = vector.shape_cast %75 : vector<1x96x1xf32> to vector<96x1xf32>
    %77 = vector.shape_cast %74 : vector<96x1xf32> to vector<1x96x1xf32>
    tpu.vector_store %arg6[%c3_51, %c0_52, %c0_53], %77 {strides = array<i32>} : memref<4x96x1xf32, #tpu.memory_space<vmem>>, vector<1x96x1xf32>,
    %78 = vector.broadcast %74 : vector<96x1xf32> to vector<96x256xf32>
    %79 = arith.mulf %64, %78 : vector<96x256xf32>
    %c3_54 = arith.constant 3 : index
    %c0_55 = arith.constant 0 : index
    %c0_56 = arith.constant 0 : index
    %80 = vector.load %arg5[%c3_54, %c0_55, %c0_56] : memref<4x96x256xf32, #tpu.memory_space<vmem>>, vector<1x96x256xf32>
    %81 = vector.shape_cast %80 : vector<1x96x256xf32> to vector<96x256xf32>
    %82 = vector.shape_cast %79 : vector<96x256xf32> to vector<1x96x256xf32>
    tpu.vector_store %arg5[%c3_54, %c0_55, %c0_56], %82 {strides = array<i32>} : memref<4x96x256xf32, #tpu.memory_space<vmem>>, vector<1x96x256xf32>,
    return
  }
  func.func @transform_0(%arg0: i32) -> (i32, i32, i32) {
    %c0_i32 = arith.constant 0 : i32
    %c0_i32_0 = arith.constant 0 : i32
    %c0_i32_1 = arith.constant 0 : i32
    return %arg0, %c0_i32, %c0_i32_0 : i32, i32, i32
  }
  func.func @transform_1(%arg0: i32) -> (i32, i32) {
    %c0_i32 = arith.constant 0 : i32
    %c0_i32_0 = arith.constant 0 : i32
    %c0_i32_1 = arith.constant 0 : i32
    return %c0_i32, %c0_i32_0 : i32, i32
  }
  func.func @transform_2(%arg0: i32) -> (i32, i32) {
    %c0_i32 = arith.constant 0 : i32
    %c0_i32_0 = arith.constant 0 : i32
    %c0_i32_1 = arith.constant 0 : i32
    return %c0_i32, %c0_i32_0 : i32, i32
  }
  func.func @transform_3(%arg0: i32) -> (i32, i32) {
    %c0_i32 = arith.constant 0 : i32
    %c0_i32_0 = arith.constant 0 : i32
    %c0_i32_1 = arith.constant 0 : i32
    return %c0_i32, %c0_i32_0 : i32, i32
  }
  func.func @transform_4(%arg0: i32) -> (i32, i32, i32) {
    %c0_i32 = arith.constant 0 : i32
    %c0_i32_0 = arith.constant 0 : i32
    %c0_i32_1 = arith.constant 0 : i32
    return %arg0, %c0_i32, %c0_i32_0 : i32, i32, i32
  }
  func.func @transform_5(%arg0: i32) -> (i32, i32, i32) {
    %c0_i32 = arith.constant 0 : i32
    %c0_i32_0 = arith.constant 0 : i32
    %c0_i32_1 = arith.constant 0 : i32
    return %arg0, %c0_i32, %c0_i32_0 : i32, i32, i32
  }
}

</mosaic_0001>

<llo_original>
// kernel: attention_module.1
$region0: #{attention_module.1}
  #allocation0 [shape = 'u32[]', space=smem, size = 0x4, offset = 0x4, fixed_abs, tag = 'smem constant byte address 0x4 - core index']
  #allocation1 [shape = 'u32[144,128]{1,0:T(1,128)}', space=vmem, size = 0x12000, scoped, tag = 'internal scratch']
  %s0 = inlined_call_operand.vmem [shape: f32[8,96,256], index: 0, kind: input, shape index: {}]
  %s1 = inlined_call_operand.vmem [shape: f32[6,96], index: 1, kind: input, shape index: {}]
  %s2 = inlined_call_operand.vmem [shape: f32[96,6], index: 2, kind: input, shape index: {}]
  %s3 = inlined_call_operand.vmem [shape: f32[256,1], index: 3, kind: input, shape index: {}]
  %s4 = inlined_call_operand.vmem [shape: f32[8,96,256], index: 4, kind: output, shape index: {0}]
  %s5 = inlined_call_operand.vmem [shape: f32[8,96,1], index: 5, kind: output, shape index: {1}]
  %6 = xla_tuple %s4, %s5
  %s7 = sld [smem:[#allocation0]]
  $region57: #{attention_module.1} parent=0
    _
  %s9 = ssub.s32 1, %s7
  %s10 = scalar_select 0, %s9, %s7
  loop: start=0, step=1, limit=4
  $region2: #{attention_module.1} parent=0 // loop_pre_header
    _
  $region3: #{attention_module.1} parent=0 // loop_header
    %s12 = sphi 0, %s16
    %p13 = scmp.ge.s32.totalorder %s12, 4
    %s22 = sphi 0, %s24
    %s25 = sphi 0, %s22
    %s26 = sphi 0, %s25
    %s42 = sphi 0, %s26
    %s46 = sphi 0, %s46
    %s48 = sphi 0, %s46
    %s49 = sphi 0, %s48
    %s63 = sphi 0, %s49
    %s67 = sphi 0, %s67
    %s69 = sphi 0, %s67
    %s70 = sphi 0, %s69
    %s84 = sphi 0, %s70
    %s88 = sphi 0, %s88
    %s90 = sphi 0, %s88
    %s91 = sphi 0, %s90
    %s105 = sphi 0, %s91
    %s111 = sphi 0, %s113
    %s114 = sphi 0, %s111
    %s115 = sphi 0, %s114
    %s131 = sphi 0, %s115
    %s137 = sphi 0, %s139
    %s140 = sphi 0, %s137
    %s141 = sphi 0, %s140
    %s157 = sphi 0, %s141
  $region4: #{attention_module.1} parent=0 // loop_header_branch
    %15 = sbr.rel (%p13) target = $region8
  $region5: #{attention_module.1} parent=0 // loop_body
    %s17 = ssub.s32 %s12, 1
    %s18 = ssub.s32 %s12, 2
    %s19 = sadd.s32 %s12, 1
    %s20 = ssub.s32 %s12, %s19
    %p21 = scmp.eq.s32.totalorder %s20, 0
    %s23 = sadd.s32 %s22, 1
    %s24 = scalar_select %p21, %s22, %s23
    %p27 = pneg %p21
    %p28 = scmp.eq.s32.totalorder %s12, 1
    %p29 = por %p27, %p28
    %p30 = scmp.ne.s32.totalorder %s22, %s25
    %p31 = scmp.eq.s32.totalorder %s12, 0
    %p32 = por %p30, %p31
    %p33 = scmp.ne.s32.totalorder %s22, %s25
    %p34 = scmp.eq.s32.totalorder %s17, 1
    %p35 = por %p33, %p34
    %p36 = scmp.ne.s32.totalorder %s25, %s26
    %p37 = scmp.eq.s32.totalorder %s17, 0
    %p38 = por %p36, %p37
    %p39 = scmp.ne.s32.totalorder %s25, %s26
    %p40 = scmp.eq.s32.totalorder %s18, 1
    %p41 = por %p39, %p40
    %p43 = scmp.ne.s32.totalorder %s26, %s42
    %p44 = scmp.eq.s32.totalorder %s18, 0
    %p45 = por %p43, %p44
    %s47 = sadd.s32 %s46, 1
    %p50 = scmp.eq.s32.totalorder %s12, 1
    %p51 = scmp.ne.s32.totalorder %s46, %s48
    %p52 = scmp.eq.s32.totalorder %s12, 0
    %p53 = por %p51, %p52
    %p54 = scmp.ne.s32.totalorder %s46, %s48
    %p55 = scmp.eq.s32.totalorder %s17, 1
    %p56 = por %p54, %p55
    %p57 = scmp.ne.s32.totalorder %s48, %s49
    %p58 = scmp.eq.s32.totalorder %s17, 0
    %p59 = por %p57, %p58
    %p60 = scmp.ne.s32.totalorder %s48, %s49
    %p61 = scmp.eq.s32.totalorder %s18, 1
    %p62 = por %p60, %p61
    %p64 = scmp.ne.s32.totalorder %s49, %s63
    %p65 = scmp.eq.s32.totalorder %s18, 0
    %p66 = por %p64, %p65
    %s68 = sadd.s32 %s67, 1
    %p71 = scmp.eq.s32.totalorder %s12, 1
    %p72 = scmp.ne.s32.totalorder %s67, %s69
    %p73 = scmp.eq.s32.totalorder %s12, 0
    %p74 = por %p72, %p73
    %p75 = scmp.ne.s32.totalorder %s67, %s69
    %p76 = scmp.eq.s32.totalorder %s17, 1
    %p77 = por %p75, %p76
    %p78 = scmp.ne.s32.totalorder %s69, %s70
    %p79 = scmp.eq.s32.totalorder %s17, 0
    %p80 = por %p78, %p79
    %p81 = scmp.ne.s32.totalorder %s69, %s70
    %p82 = scmp.eq.s32.totalorder %s18, 1
    %p83 = por %p81, %p82
    %p85 = scmp.ne.s32.totalorder %s70, %s84
    %p86 = scmp.eq.s32.totalorder %s18, 0
    %p87 = por %p85, %p86
    %s89 = sadd.s32 %s88, 1
    %p92 = scmp.eq.s32.totalorder %s12, 1
    %p93 = scmp.ne.s32.totalorder %s88, %s90
    %p94 = scmp.eq.s32.totalorder %s12, 0
    %p95 = por %p93, %p94
    %p96 = scmp.ne.s32.totalorder %s88, %s90
    %p97 = scmp.eq.s32.totalorder %s17, 1
    %p98 = por %p96, %p97
    %p99 = scmp.ne.s32.totalorder %s90, %s91
    %p100 = scmp.eq.s32.totalorder %s17, 0
    %p101 = por %p99, %p100
    %p102 = scmp.ne.s32.totalorder %s90, %s91
    %p103 = scmp.eq.s32.totalorder %s18, 1
    %p104 = por %p102, %p103
    %p106 = scmp.ne.s32.totalorder %s91, %s105
    %p107 = scmp.eq.s32.totalorder %s18, 0
    %p108 = por %p106, %p107
    %s109 = ssub.s32 %s12, %s19
    %p110 = scmp.eq.s32.totalorder %s109, 0
    %s112 = sadd.s32 %s111, 1
    %s113 = scalar_select %p110, %s111, %s112
    %p116 = pneg %p110
    %p117 = scmp.eq.s32.totalorder %s12, 1
    %p118 = por %p116, %p117
    %p119 = scmp.ne.s32.totalorder %s111, %s114
    %p120 = scmp.eq.s32.totalorder %s12, 0
    %p121 = por %p119, %p120
    %p122 = scmp.ne.s32.totalorder %s111, %s114
    %p123 = scmp.eq.s32.totalorder %s17, 1
    %p124 = por %p122, %p123
    %p125 = scmp.ne.s32.totalorder %s114, %s115
    %p126 = scmp.eq.s32.totalorder %s17, 0
    %p127 = por %p125, %p126
    %p128 = scmp.ne.s32.totalorder %s114, %s115
    %p129 = scmp.eq.s32.totalorder %s18, 1
    %p130 = por %p128, %p129
    %p132 = scmp.ne.s32.totalorder %s115, %s131
    %p133 = scmp.eq.s32.totalorder %s18, 0
    %p134 = por %p132, %p133
    %s135 = ssub.s32 %s12, %s19
    %p136 = scmp.eq.s32.totalorder %s135, 0
    %s138 = sadd.s32 %s137, 1
    %s139 = scalar_select %p136, %s137, %s138
    %p142 = pneg %p136
    %p143 = scmp.eq.s32.totalorder %s12, 1
    %p144 = por %p142, %p143
    %p145 = scmp.ne.s32.totalorder %s137, %s140
    %p146 = scmp.eq.s32.totalorder %s12, 0
    %p147 = por %p145, %p146
    %p148 = scmp.ne.s32.totalorder %s137, %s140
    %p149 = scmp.eq.s32.totalorder %s17, 1
    %p150 = por %p148, %p149
    %p151 = scmp.ne.s32.totalorder %s140, %s141
    %p152 = scmp.eq.s32.totalorder %s17, 0
    %p153 = por %p151, %p152
    %p154 = scmp.ne.s32.totalorder %s140, %s141
    %p155 = scmp.eq.s32.totalorder %s18, 1
    %p156 = por %p154, %p155
    %p158 = scmp.ne.s32.totalorder %s141, %s157
    %p159 = scmp.eq.s32.totalorder %s18, 0
    %p160 = por %p158, %p159
    %p161 = scmp.le.s32.totalorder 1, %s12
    %p162 = scmp.lt.s32.totalorder %s12, 3
    %p163 = pnand %p161, %p162
    %p164 = pneg %p163
    // Predicated region
    $region9: #{attention_module.1} parent=5 // pred_check
      _
    $region10: #{attention_module.1} parent=5 // pred_check_branch
      %166 = sbr.rel (%p163) target = $region12
    $region11: #{attention_module.1} parent=5 // pred_region
      %s167 = ssub.s32 %s12, 1
      // Predicated region
      $region13: #{attention_module.1} parent=11 // pred_check
        %p168 = pneg %p59
      $region14: #{attention_module.1} parent=11 // pred_check_branch
        %170 = sbr.rel (%p168) target = $region16
      $region15: #{attention_module.1} parent=11 // pred_region
        _
      $region16: #{attention_module.1} parent=11 // pred_fallthru
        _
      // Predicated region
      $region17: #{attention_module.1} parent=11 // pred_check
        %p171 = pneg %p80
      $region18: #{attention_module.1} parent=11 // pred_check_branch
        %173 = sbr.rel (%p171) target = $region20
      $region19: #{attention_module.1} parent=11 // pred_region
        _
      $region20: #{attention_module.1} parent=11 // pred_fallthru
        _
      // Predicated region
      $region21: #{attention_module.1} parent=11 // pred_check
        %p174 = pneg %p101
      $region22: #{attention_module.1} parent=11 // pred_check_branch
        %176 = sbr.rel (%p174) target = $region24
      $region23: #{attention_module.1} parent=11 // pred_region
        _
      $region24: #{attention_module.1} parent=11 // pred_fallthru
        _
    $region12: #{attention_module.1} parent=5 // pred_fallthru
      _
    %p177 = scmp.lt.s32.totalorder %s12, 2
    // Predicated region
    $region25: #{attention_module.1} parent=5 // pred_check
      %p178 = pneg %p177
    $region26: #{attention_module.1} parent=5 // pred_check_branch
      %180 = sbr.rel (%p178) target = $region28
    $region27: #{attention_module.1} parent=5 // pred_region
      // Predicated region
      $region29: #{attention_module.1} parent=27 // pred_check
        %p181 = pneg %p32
      $region30: #{attention_module.1} parent=27 // pred_check_branch
        %183 = sbr.rel (%p181) target = $region32
      $region31: #{attention_module.1} parent=27 // pred_region
        %s184 = smul.u32 4, %s12
        %p185 = scmp.lt.s32.totalorder %s184, 7
        %s186 = scalar_select %p185, %s184, 7
        %s187 = smul.addr %s186, 24
        %s188 = smul.addr %s187, 8
        %s189 = scalar_lea.vmem %s0, %s188
        %s190 = smul.u32 4, %s12
      $region32: #{attention_module.1} parent=27 // pred_fallthru
        _
    $region28: #{attention_module.1} parent=5 // pred_fallthru
      _
    %p191 = scmp.le.s32.totalorder 1, %s12
    %p192 = scmp.lt.s32.totalorder %s12, 3
    %p193 = pnand %p191, %p192
    %p194 = pneg %p193
    // Predicated region
    $region33: #{attention_module.1} parent=5 // pred_check
      _
    $region34: #{attention_module.1} parent=5 // pred_check_branch
      %196 = sbr.rel (%p193) target = $region36
    $region35: #{attention_module.1} parent=5 // pred_region
      %s197 = ssub.s32 %s12, 1
      %s198 = smul.u32 4, %s17
      %p199 = scmp.lt.s32.totalorder %s198, 7
      %s200 = scalar_select %p199, %s198, 7
      %s201 = smul.addr %s200, 24
      %s202 = smul.addr %s201, 8
      %s203 = scalar_lea.vmem %s0, %s202
      %p204 = pneg %p38
      %p205 = pneg %p35
      %p206 = pneg %p59
      %p207 = pneg %p56
      %p208 = pneg %p80
      %p209 = pneg %p77
      %p210 = pneg %p101
      %p211 = pneg %p98
      %p212 = pneg %p127
      %p213 = pneg %p124
      %s214 = smul.u32 4, %s17
      %p215 = scmp.lt.s32.totalorder %s214, 7
      %s216 = scalar_select %p215, %s214, 7
      %s217 = smul.addr %s216, 24
      %s218 = smul.addr %s217, 8
      %s219 = scalar_lea.vmem %s4, %s218
      %p220 = pneg %p153
      %p221 = pneg %p150
      %s222 = smul.u32 4, %s17
      %p223 = scmp.lt.s32.totalorder %s222, 7
      %s224 = scalar_select %p223, %s222, 7
      %s225 = smul.addr %s224, 12
      %s226 = smul.addr %s225, 8
      %s227 = scalar_lea.vmem %s5, %s226
      %s228 = smul.u32 4, %s17
      %p229 = scmp.lt.s32.totalorder %s228, 7
      %s230 = scalar_select %p229, %s228, 7
      %s231 = smul.addr %s230, 24
      %s232 = smul.addr %s231, 8
      %s233 = scalar_lea.vmem %s0, %s232
      %s234 = smul.u32 4, %s17
      %s235 = smul.u32 4, %s17
      %p236 = scmp.lt.s32.totalorder %s235, 7
      %s237 = scalar_select %p236, %s235, 7
      %s238 = smul.addr %s237, 24
      %s239 = smul.addr %s238, 8
      %s240 = scalar_lea.vmem %s4, %s239
      %s241 = smul.u32 4, %s17
      %s242 = smul.u32 4, %s17
      %p243 = scmp.lt.s32.totalorder %s242, 7
      %s244 = scalar_select %p243, %s242, 7
      %s245 = smul.addr %s244, 12
      %s246 = smul.addr %s245, 8
      %s247 = scalar_lea.vmem %s5, %s246
      %s248 = smul.u32 4, %s17
      %v249 = vld [vmem:[%s1] sm:$0x3f]
      %v250 = vld [vmem:[%s2] sm:$0xff]
      %v251 = vld [vmem:[%s2 + $0x8] sm:$0xff]
      %v252 = vld [vmem:[%s2 + $0x10] sm:$0xff]
      %v253 = vld [vmem:[%s2 + $0x18] sm:$0xff]
      %v254 = vld [vmem:[%s2 + $0x20] sm:$0xff]
      %v255 = vld [vmem:[%s2 + $0x28] sm:$0xff]
      %v256 = vld [vmem:[%s2 + $0x30] sm:$0xff]
      %v257 = vld [vmem:[%s2 + $0x38] sm:$0xff]
      %v258 = vld [vmem:[%s2 + $0x40] sm:$0xff]
      %v259 = vld [vmem:[%s2 + $0x48] sm:$0xff]
      %v260 = vld [vmem:[%s2 + $0x50] sm:$0xff]
      %v261 = vld [vmem:[%s2 + $0x58] sm:$0xff]
      %v262 = vld [vmem:[%s3] sm:$0xff]
      %v263 = vld [vmem:[%s3 + $0x8] sm:$0xff]
      %v264 = vld [vmem:[%s3 + $0x10] sm:$0xff]
      %v265 = vld [vmem:[%s3 + $0x18] sm:$0xff]
      %v266 = vld [vmem:[%s3 + $0x20] sm:$0xff]
      %v267 = vld [vmem:[%s3 + $0x28] sm:$0xff]
      %v268 = vld [vmem:[%s3 + $0x30] sm:$0xff]
      %v269 = vld [vmem:[%s3 + $0x38] sm:$0xff]
      %v270 = vld [vmem:[%s3 + $0x40] sm:$0xff]
      %v271 = vld [vmem:[%s3 + $0x48] sm:$0xff]
      %v272 = vld [vmem:[%s3 + $0x50] sm:$0xff]
      %v273 = vld [vmem:[%s3 + $0x58] sm:$0xff]
      %v274 = vld [vmem:[%s3 + $0x60] sm:$0xff]
      %v275 = vld [vmem:[%s3 + $0x68] sm:$0xff]
      %v276 = vld [vmem:[%s3 + $0x70] sm:$0xff]
      %v277 = vld [vmem:[%s3 + $0x78] sm:$0xff]
      %v278 = vld [vmem:[%s3 + $0x80] sm:$0xff]
      %v279 = vld [vmem:[%s3 + $0x88] sm:$0xff]
      %v280 = vld [vmem:[%s3 + $0x90] sm:$0xff]
      %v281 = vld [vmem:[%s3 + $0x98] sm:$0xff]
      %v282 = vld [vmem:[%s3 + $0xa0] sm:$0xff]
      %v283 = vld [vmem:[%s3 + $0xa8] sm:$0xff]
      %v284 = vld [vmem:[%s3 + $0xb0] sm:$0xff]
      %v285 = vld [vmem:[%s3 + $0xb8] sm:$0xff]
      %v286 = vld [vmem:[%s3 + $0xc0] sm:$0xff]
      %v287 = vld [vmem:[%s3 + $0xc8] sm:$0xff]
      %v288 = vld [vmem:[%s3 + $0xd0] sm:$0xff]
      %v289 = vld [vmem:[%s3 + $0xd8] sm:$0xff]
      %v290 = vld [vmem:[%s3 + $0xe0] sm:$0xff]
      %v291 = vld [vmem:[%s3 + $0xe8] sm:$0xff]
      %v292 = vld [vmem:[%s3 + $0xf0] sm:$0xff]
      %v293 = vld [vmem:[%s3 + $0xf8] sm:$0xff]
      %v294 = vld [vmem:[%s233] sm:$0xff]
      %v295 = vld [vmem:[%s233 + $0x8] sm:$0xff]
      %v296 = vld [vmem:[%s233 + $0x10] sm:$0xff]
      %v297 = vld [vmem:[%s233 + $0x18] sm:$0xff]
      %v298 = vld [vmem:[%s233 + $0x20] sm:$0xff]
      %v299 = vld [vmem:[%s233 + $0x28] sm:$0xff]
      %v300 = vld [vmem:[%s233 + $0x30] sm:$0xff]
      %v301 = vld [vmem:[%s233 + $0x38] sm:$0xff]
      %v302 = vld [vmem:[%s233 + $0x40] sm:$0xff]
      %v303 = vld [vmem:[%s233 + $0x48] sm:$0xff]
      %v304 = vld [vmem:[%s233 + $0x50] sm:$0xff]
      %v305 = vld [vmem:[%s233 + $0x58] sm:$0xff]
      %v306 = vld [vmem:[%s233 + $0x60] sm:$0xff]
      %v307 = vld [vmem:[%s233 + $0x68] sm:$0xff]
      %v308 = vld [vmem:[%s233 + $0x70] sm:$0xff]
      %v309 = vld [vmem:[%s233 + $0x78] sm:$0xff]
      %v310 = vld [vmem:[%s233 + $0x80] sm:$0xff]
      %v311 = vld [vmem:[%s233 + $0x88] sm:$0xff]
      %v312 = vld [vmem:[%s233 + $0x90] sm:$0xff]
      %v313 = vld [vmem:[%s233 + $0x98] sm:$0xff]
      %v314 = vld [vmem:[%s233 + $0xa0] sm:$0xff]
      %v315 = vld [vmem:[%s233 + $0xa8] sm:$0xff]
      %v316 = vld [vmem:[%s233 + $0xb0] sm:$0xff]
      %v317 = vld [vmem:[%s233 + $0xb8] sm:$0xff]
      %318 = vmatprep.subr.mxu0 0.0
      %319 = vmatpush1.msra.mxu0 %v277
      %320 = vmatprep.subr.mxu0 0.0
      %321 = vmatpush1.msra.mxu0 %v276
      %322 = vmatprep.subr.mxu0 0.0
      %323 = vmatpush1.msra.mxu0 %v275
      %324 = vmatprep.subr.mxu0 0.0
      %325 = vmatpush1.msra.mxu0 %v274
      %326 = vmatprep.subr.mxu0 0.0
      %327 = vmatpush1.msra.mxu0 %v273
      %328 = vmatprep.subr.mxu0 0.0
      %329 = vmatpush1.msra.mxu0 %v272
      %330 = vmatprep.subr.mxu0 0.0
      %331 = vmatpush1.msra.mxu0 %v271
      %332 = vmatprep.subr.mxu0 0.0
      %333 = vmatpush1.msra.mxu0 %v270
      %334 = vmatprep.subr.mxu0 0.0
      %335 = vmatpush1.msra.mxu0 %v269
      %336 = vmatprep.subr.mxu0 0.0
      %337 = vmatpush1.msra.mxu0 %v268
      %338 = vmatprep.subr.mxu0 0.0
      %339 = vmatpush1.msra.mxu0 %v267
      %340 = vmatprep.subr.mxu0 0.0
      %341 = vmatpush1.msra.mxu0 %v266
      %342 = vmatprep.subr.mxu0 0.0
      %343 = vmatpush1.msra.mxu0 %v265
      %344 = vmatprep.subr.mxu0 0.0
      %345 = vmatpush1.msra.mxu0 %v264
      %346 = vmatprep.subr.mxu0 0.0
      %347 = vmatpush1.msra.mxu0 %v263
      %348 = vmatprep.subr.mxu0 0.0
      %349 = vmatpush1.msra.mxu0 %v262
      %350 = vmatprep.subr.mxu0 0.0
      %351 = vmatpush2.msra.mxu0 %v293
      %352 = vmatprep.subr.mxu0 0.0
      %353 = vmatpush2.msra.mxu0 %v292
      %354 = vmatprep.subr.mxu0 0.0
      %355 = vmatpush2.msra.mxu0 %v291
      %356 = vmatprep.subr.mxu0 0.0
      %357 = vmatpush2.msra.mxu0 %v290
      %358 = vmatprep.subr.mxu0 0.0
      %359 = vmatpush2.msra.mxu0 %v289
      %360 = vmatprep.subr.mxu0 0.0
      %361 = vmatpush2.msra.mxu0 %v288
      %362 = vmatprep.subr.mxu0 0.0
      %363 = vmatpush2.msra.mxu0 %v287
      %364 = vmatprep.subr.mxu0 0.0
      %365 = vmatpush2.msra.mxu0 %v286
      %366 = vmatprep.subr.mxu0 0.0
      %367 = vmatpush2.msra.mxu0 %v285
      %368 = vmatprep.subr.mxu0 0.0
      %369 = vmatpush2.msra.mxu0 %v284
      %370 = vmatprep.subr.mxu0 0.0
      %371 = vmatpush2.msra.mxu0 %v283
      %372 = vmatprep.subr.mxu0 0.0
      %373 = vmatpush2.msra.mxu0 %v282
      %374 = vmatprep.subr.mxu0 0.0
      %375 = vmatpush2.msra.mxu0 %v281
      %376 = vmatprep.subr.mxu0 0.0
      %377 = vmatpush2.msra.mxu0 %v280
      %378 = vmatprep.subr.mxu0 0.0
      %379 = vmatpush2.msra.mxu0 %v279
      %380 = vmatprep.subr.mxu0 0.0
      %381 = vmatpush2.msra.mxu0 %v278
      %382 = vmatprep.mubr.f32.mxu0 %v295
      %383 = vmatmul.mubr.f32.gmra.mxu0 %v294
      %v384 = vpop.f32.mrf.mxu0
      %v385 = vadd.f32 0.0, %v384
      %v386 = vpop.f32.mrf.mxu0
      %387 = vmatprep.mubr.f32.mxu0 %v297
      %388 = vmatmul.mubr.f32.gmra.mxu0 %v296
      %v389 = vpop.f32.mrf.mxu0
      %v390 = vadd.f32 0.0, %v389
      %v391 = vpop.f32.mrf.mxu0
      %392 = vmatprep.mubr.f32.mxu0 %v299
      %393 = vmatmul.mubr.f32.gmra.mxu0 %v298
      %v394 = vpop.f32.mrf.mxu0
      %v395 = vadd.f32 0.0, %v394
      %v396 = vpop.f32.mrf.mxu0
      %397 = vmatprep.mubr.f32.mxu0 %v301
      %398 = vmatmul.mubr.f32.gmra.mxu0 %v300
      %v399 = vpop.f32.mrf.mxu0
      %v400 = vadd.f32 0.0, %v399
      %v401 = vpop.f32.mrf.mxu0
      %402 = vmatprep.mubr.f32.mxu0 %v303
      %403 = vmatmul.mubr.f32.gmra.mxu0 %v302
      %v404 = vpop.f32.mrf.mxu0
      %v405 = vadd.f32 0.0, %v404
      %v406 = vpop.f32.mrf.mxu0
      %407 = vmatprep.mubr.f32.mxu0 %v305
      %408 = vmatmul.mubr.f32.gmra.mxu0 %v304
      %v409 = vpop.f32.mrf.mxu0
      %v410 = vadd.f32 0.0, %v409
      %v411 = vpop.f32.mrf.mxu0
      %412 = vmatprep.mubr.f32.mxu0 %v307
      %413 = vmatmul.mubr.f32.gmra.mxu0 %v306
      %v414 = vpop.f32.mrf.mxu0
      %v415 = vadd.f32 0.0, %v414
      %v416 = vpop.f32.mrf.mxu0
      %417 = vmatprep.mubr.f32.mxu0 %v309
      %418 = vmatmul.mubr.f32.gmra.mxu0 %v308
      %v419 = vpop.f32.mrf.mxu0
      %v420 = vadd.f32 0.0, %v419
      %v421 = vpop.f32.mrf.mxu0
      %422 = vmatprep.mubr.f32.mxu0 %v311
      %423 = vmatmul.mubr.f32.gmra.mxu0 %v310
      %v424 = vpop.f32.mrf.mxu0
      %v425 = vadd.f32 0.0, %v424
      %v426 = vpop.f32.mrf.mxu0
      %427 = vmatprep.mubr.f32.mxu0 %v313
      %428 = vmatmul.mubr.f32.gmra.mxu0 %v312
      %v429 = vpop.f32.mrf.mxu0
      %v430 = vadd.f32 0.0, %v429
      %v431 = vpop.f32.mrf.mxu0
      %432 = vmatprep.mubr.f32.mxu0 %v315
      %433 = vmatmul.mubr.f32.gmra.mxu0 %v314
      %v434 = vpop.f32.mrf.mxu0
      %v435 = vadd.f32 0.0, %v434
      %v436 = vpop.f32.mrf.mxu0
      %437 = vmatprep.mubr.f32.mxu0 %v317
      %438 = vmatmul.mubr.f32.gmra.mxu0 %v316
      %v439 = vpop.f32.mrf.mxu0
      %v440 = vadd.f32 0.0, %v439
      %v441 = vpop.f32.mrf.mxu0
      %442 = vdwg.mxu0
      %vm443 = vcmask 785408
      %v445 = vsel %vm443, %v249, 0
      %447 = vmatprep.subr.mxu0 0.0
      %448 = vmatpush1.msra.mxu0 0.0
      %449 = vmatprep.subr.mxu0 0.0
      %450 = vmatpush1.msra.mxu0 0.0
      %451 = vmatprep.subr.mxu0 0.0
      %452 = vmatpush1.msra.mxu0 0.0
      %453 = vmatprep.subr.mxu0 0.0
      %454 = vmatpush1.msra.mxu0 0.0
      %455 = vmatprep.subr.mxu0 0.0
      %456 = vmatpush1.msra.mxu0 %v440
      %457 = vmatprep.subr.mxu0 0.0
      %458 = vmatpush1.msra.mxu0 %v435
      %459 = vmatprep.subr.mxu0 0.0
      %460 = vmatpush1.msra.mxu0 %v430
      %461 = vmatprep.subr.mxu0 0.0
      %462 = vmatpush1.msra.mxu0 %v425
      %463 = vmatprep.subr.mxu0 0.0
      %464 = vmatpush1.msra.mxu0 %v420
      %465 = vmatprep.subr.mxu0 0.0
      %466 = vmatpush1.msra.mxu0 %v415
      %467 = vmatprep.subr.mxu0 0.0
      %468 = vmatpush1.msra.mxu0 %v410
      %469 = vmatprep.subr.mxu0 0.0
      %470 = vmatpush1.msra.mxu0 %v405
      %471 = vmatprep.subr.mxu0 0.0
      %472 = vmatpush1.msra.mxu0 %v400
      %473 = vmatprep.subr.mxu0 0.0
      %474 = vmatpush1.msra.mxu0 %v395
      %475 = vmatprep.subr.mxu0 0.0
      %476 = vmatpush1.msra.mxu0 %v390
      %477 = vmatprep.subr.mxu0 0.0
      %478 = vmatpush1.msra.mxu0 %v385
      %479 = vmatprep.subr.mxu0 0.0
      %480 = vmatpush2.msra.mxu0 0.0
      %481 = vmatprep.subr.mxu0 0.0
      %482 = vmatpush2.msra.mxu0 0.0
      %483 = vmatprep.subr.mxu0 0.0
      %484 = vmatpush2.msra.mxu0 0.0
      %485 = vmatprep.subr.mxu0 0.0
      %486 = vmatpush2.msra.mxu0 0.0
      %487 = vmatprep.subr.mxu0 0.0
      %488 = vmatpush2.msra.mxu0 0.0
      %489 = vmatprep.subr.mxu0 0.0
      %490 = vmatpush2.msra.mxu0 0.0
      %491 = vmatprep.subr.mxu0 0.0
      %492 = vmatpush2.msra.mxu0 0.0
      %493 = vmatprep.subr.mxu0 0.0
      %494 = vmatpush2.msra.mxu0 0.0
      %495 = vmatprep.subr.mxu0 0.0
      %496 = vmatpush2.msra.mxu0 0.0
      %497 = vmatprep.subr.mxu0 0.0
      %498 = vmatpush2.msra.mxu0 0.0
      %499 = vmatprep.subr.mxu0 0.0
      %500 = vmatpush2.msra.mxu0 0.0
      %501 = vmatprep.subr.mxu0 0.0
      %502 = vmatpush2.msra.mxu0 0.0
      %503 = vmatprep.subr.mxu0 0.0
      %504 = vmatpush2.msra.mxu0 0.0
      %505 = vmatprep.subr.mxu0 0.0
      %506 = vmatpush2.msra.mxu0 0.0
      %507 = vmatprep.subr.mxu0 0.0
      %508 = vmatpush2.msra.mxu0 0.0
      %509 = vmatprep.subr.mxu0 0.0
      %510 = vmatpush2.msra.mxu0 0.0
      %511 = vmatprep.mubr.f32.mxu0 0.0
      %512 = vmatmul.mubr.f32.gmra.mxu0 %v445
      %v513 = vpop.f32.mrf.mxu0
      %v514 = vadd.f32 0.0, %v513
      %v515 = vpop.f32.mrf.mxu0
      %516 = vdwg.mxu0
      %v517 = vmax.f32 %v514, 0.0
      %vm518 = vcmask 48128
      %v520 = vsel %vm518, %v250, 0
      %v523 = vsel %vm518, %v251, 0
      %v526 = vsel %vm518, %v252, 0
      %v529 = vsel %vm518, %v253, 0
      %v532 = vsel %vm518, %v254, 0
      %v535 = vsel %vm518, %v255, 0
      %v538 = vsel %vm518, %v256, 0
      %v541 = vsel %vm518, %v257, 0
      %v544 = vsel %vm518, %v258, 0
      %v547 = vsel %vm518, %v259, 0
      %v550 = vsel %vm518, %v260, 0
      %v553 = vsel %vm518, %v261, 0
      %vm555 = vcmask 1045504
      %v557 = vsel %vm555, %v517, 0
      %559 = vmatprep.subr.mxu0 0.0
      %560 = vmatpush1.msra.mxu0 0.0
      %561 = vmatprep.subr.mxu0 0.0
      %562 = vmatpush1.msra.mxu0 0.0
      %563 = vmatprep.subr.mxu0 0.0
      %564 = vmatpush1.msra.mxu0 0.0
      %565 = vmatprep.subr.mxu0 0.0
      %566 = vmatpush1.msra.mxu0 0.0
      %567 = vmatprep.subr.mxu0 0.0
      %568 = vmatpush1.msra.mxu0 0.0
      %569 = vmatprep.subr.mxu0 0.0
      %570 = vmatpush1.msra.mxu0 0.0
      %571 = vmatprep.subr.mxu0 0.0
      %572 = vmatpush1.msra.mxu0 0.0
      %573 = vmatprep.subr.mxu0 0.0
      %574 = vmatpush1.msra.mxu0 0.0
      %575 = vmatprep.subr.mxu0 0.0
      %576 = vmatpush1.msra.mxu0 0.0
      %577 = vmatprep.subr.mxu0 0.0
      %578 = vmatpush1.msra.mxu0 0.0
      %579 = vmatprep.subr.mxu0 0.0
      %580 = vmatpush1.msra.mxu0 0.0
      %581 = vmatprep.subr.mxu0 0.0
      %582 = vmatpush1.msra.mxu0 0.0
      %583 = vmatprep.subr.mxu0 0.0
      %584 = vmatpush1.msra.mxu0 0.0
      %585 = vmatprep.subr.mxu0 0.0
      %586 = vmatpush1.msra.mxu0 0.0
      %587 = vmatprep.subr.mxu0 0.0
      %588 = vmatpush1.msra.mxu0 0.0
      %589 = vmatprep.subr.mxu0 0.0
      %590 = vmatpush1.msra.mxu0 %v557
      %591 = vmatprep.subr.mxu0 0.0
      %592 = vmatpush2.msra.mxu0 0.0
      %593 = vmatprep.subr.mxu0 0.0
      %594 = vmatpush2.msra.mxu0 0.0
      %595 = vmatprep.subr.mxu0 0.0
      %596 = vmatpush2.msra.mxu0 0.0
      %597 = vmatprep.subr.mxu0 0.0
      %598 = vmatpush2.msra.mxu0 0.0
      %599 = vmatprep.subr.mxu0 0.0
      %600 = vmatpush2.msra.mxu0 0.0
      %601 = vmatprep.subr.mxu0 0.0
      %602 = vmatpush2.msra.mxu0 0.0
      %603 = vmatprep.subr.mxu0 0.0
      %604 = vmatpush2.msra.mxu0 0.0
      %605 = vmatprep.subr.mxu0 0.0
      %606 = vmatpush2.msra.mxu0 0.0
      %607 = vmatprep.subr.mxu0 0.0
      %608 = vmatpush2.msra.mxu0 0.0
      %609 = vmatprep.subr.mxu0 0.0
      %610 = vmatpush2.msra.mxu0 0.0
      %611 = vmatprep.subr.mxu0 0.0
      %612 = vmatpush2.msra.mxu0 0.0
      %613 = vmatprep.subr.mxu0 0.0
      %614 = vmatpush2.msra.mxu0 0.0
      %615 = vmatprep.subr.mxu0 0.0
      %616 = vmatpush2.msra.mxu0 0.0
      %617 = vmatprep.subr.mxu0 0.0
      %618 = vmatpush2.msra.mxu0 0.0
      %619 = vmatprep.subr.mxu0 0.0
      %620 = vmatpush2.msra.mxu0 0.0
      %621 = vmatprep.subr.mxu0 0.0
      %622 = vmatpush2.msra.mxu0 0.0
      %623 = vmatprep.mubr.f32.mxu0 0.0
      %624 = vmatmul.mubr.f32.gmra.mxu0 %v520
      %v625 = vpop.f32.mrf.mxu0
      %v626 = vadd.f32 0.0, %v625
      %v627 = vpop.f32.mrf.mxu0
      %628 = vmatprep.mubr.f32.mxu0 0.0
      %629 = vmatmul.mubr.f32.gmra.mxu0 %v523
      %v630 = vpop.f32.mrf.mxu0
      %v631 = vadd.f32 0.0, %v630
      %v632 = vpop.f32.mrf.mxu0
      %633 = vmatprep.mubr.f32.mxu0 0.0
      %634 = vmatmul.mubr.f32.gmra.mxu0 %v526
      %v635 = vpop.f32.mrf.mxu0
      %v636 = vadd.f32 0.0, %v635
      %v637 = vpop.f32.mrf.mxu0
      %638 = vmatprep.mubr.f32.mxu0 0.0
      %639 = vmatmul.mubr.f32.gmra.mxu0 %v529
      %v640 = vpop.f32.mrf.mxu0
      %v641 = vadd.f32 0.0, %v640
      %v642 = vpop.f32.mrf.mxu0
      %643 = vmatprep.mubr.f32.mxu0 0.0
      %644 = vmatmul.mubr.f32.gmra.mxu0 %v532
      %v645 = vpop.f32.mrf.mxu0
      %v646 = vadd.f32 0.0, %v645
      %v647 = vpop.f32.mrf.mxu0
      %648 = vmatprep.mubr.f32.mxu0 0.0
      %649 = vmatmul.mubr.f32.gmra.mxu0 %v535
      %v650 = vpop.f32.mrf.mxu0
      %v651 = vadd.f32 0.0, %v650
      %v652 = vpop.f32.mrf.mxu0
      %653 = vmatprep.mubr.f32.mxu0 0.0
      %654 = vmatmul.mubr.f32.gmra.mxu0 %v538
      %v655 = vpop.f32.mrf.mxu0
      %v656 = vadd.f32 0.0, %v655
      %v657 = vpop.f32.mrf.mxu0
      %658 = vmatprep.mubr.f32.mxu0 0.0
      %659 = vmatmul.mubr.f32.gmra.mxu0 %v541
      %v660 = vpop.f32.mrf.mxu0
      %v661 = vadd.f32 0.0, %v660
      %v662 = vpop.f32.mrf.mxu0
      %663 = vmatprep.mubr.f32.mxu0 0.0
      %664 = vmatmul.mubr.f32.gmra.mxu0 %v544
      %v665 = vpop.f32.mrf.mxu0
      %v666 = vadd.f32 0.0, %v665
      %v667 = vpop.f32.mrf.mxu0
      %668 = vmatprep.mubr.f32.mxu0 0.0
      %669 = vmatmul.mubr.f32.gmra.mxu0 %v547
      %v670 = vpop.f32.mrf.mxu0
      %v671 = vadd.f32 0.0, %v670
      %v672 = vpop.f32.mrf.mxu0
      %673 = vmatprep.mubr.f32.mxu0 0.0
      %674 = vmatmul.mubr.f32.gmra.mxu0 %v550
      %v675 = vpop.f32.mrf.mxu0
      %v676 = vadd.f32 0.0, %v675
      %v677 = vpop.f32.mrf.mxu0
      %678 = vmatprep.mubr.f32.mxu0 0.0
      %679 = vmatmul.mubr.f32.gmra.mxu0 %v553
      %v680 = vpop.f32.mrf.mxu0
      %v681 = vadd.f32 0.0, %v680
      %v682 = vpop.f32.mrf.mxu0
      %683 = vdwg.mxu0
      %v684 = vxor.u32 %v626, 2147483648
      %v685 = vxor.u32 %v631, 2147483648
      %v686 = vxor.u32 %v636, 2147483648
      %v687 = vxor.u32 %v641, 2147483648
      %v688 = vxor.u32 %v646, 2147483648
      %v689 = vxor.u32 %v651, 2147483648
      %v690 = vxor.u32 %v656, 2147483648
      %v691 = vxor.u32 %v661, 2147483648
      %v692 = vxor.u32 %v666, 2147483648
      %v693 = vxor.u32 %v671, 2147483648
      %v694 = vxor.u32 %v676, 2147483648
      %v695 = vxor.u32 %v681, 2147483648
      %v696 = vmul.f32 %v684, 1.442695
      %v697 = vpow.pop %v696
      %v698 = vmul.f32 %v685, 1.442695
      %v699 = vpow.pop %v698
      %v700 = vmul.f32 %v686, 1.442695
      %v701 = vpow.pop %v700
      %v702 = vmul.f32 %v687, 1.442695
      %v703 = vpow.pop %v702
      %v704 = vmul.f32 %v688, 1.442695
      %v705 = vpow.pop %v704
      %v706 = vmul.f32 %v689, 1.442695
      %v707 = vpow.pop %v706
      %v708 = vmul.f32 %v690, 1.442695
      %v709 = vpow.pop %v708
      %v710 = vmul.f32 %v691, 1.442695
      %v711 = vpow.pop %v710
      %v712 = vmul.f32 %v692, 1.442695
      %v713 = vpow.pop %v712
      %v714 = vmul.f32 %v693, 1.442695
      %v715 = vpow.pop %v714
      %v716 = vmul.f32 %v694, 1.442695
      %v717 = vpow.pop %v716
      %v718 = vmul.f32 %v695, 1.442695
      %v719 = vpow.pop %v718
      %v720 = vadd.f32 %v697, 1.0
      %v721 = vadd.f32 %v699, 1.0
      %v722 = vadd.f32 %v701, 1.0
      %v723 = vadd.f32 %v703, 1.0
      %v724 = vadd.f32 %v705, 1.0
      %v725 = vadd.f32 %v707, 1.0
      %v726 = vadd.f32 %v709, 1.0
      %v727 = vadd.f32 %v711, 1.0
      %v728 = vadd.f32 %v713, 1.0
      %v729 = vadd.f32 %v715, 1.0
      %v730 = vadd.f32 %v717, 1.0
      %v731 = vadd.f32 %v719, 1.0
      %v732 = vrcp.pop %v720
      %v733 = vmul.f32 1.0, %v732
      %v734 = vrcp.pop %v721
      %v735 = vmul.f32 1.0, %v734
      %v736 = vrcp.pop %v722
      %v737 = vmul.f32 1.0, %v736
      %v738 = vrcp.pop %v723
      %v739 = vmul.f32 1.0, %v738
      %v740 = vrcp.pop %v724
      %v741 = vmul.f32 1.0, %v740
      %v742 = vrcp.pop %v725
      %v743 = vmul.f32 1.0, %v742
      %v744 = vrcp.pop %v726
      %v745 = vmul.f32 1.0, %v744
      %v746 = vrcp.pop %v727
      %v747 = vmul.f32 1.0, %v746
      %v748 = vrcp.pop %v728
      %v749 = vmul.f32 1.0, %v748
      %v750 = vrcp.pop %v729
      %v751 = vmul.f32 1.0, %v750
      %v752 = vrcp.pop %v730
      %v753 = vmul.f32 1.0, %v752
      %v754 = vrcp.pop %v731
      %v755 = vmul.f32 1.0, %v754
      %vm756 = vcmask 7168
      %757 = vst.msk [vmem:[%s247] sm:$0xff] %vm756, %v733
      %758 = vst.msk [vmem:[%s247 + $0x8] sm:$0xff] %vm756, %v735
      %759 = vst.msk [vmem:[%s247 + $0x10] sm:$0xff] %vm756, %v737
      %760 = vst.msk [vmem:[%s247 + $0x18] sm:$0xff] %vm756, %v739
      %761 = vst.msk [vmem:[%s247 + $0x20] sm:$0xff] %vm756, %v741
      %762 = vst.msk [vmem:[%s247 + $0x28] sm:$0xff] %vm756, %v743
      %763 = vst.msk [vmem:[%s247 + $0x30] sm:$0xff] %vm756, %v745
      %764 = vst.msk [vmem:[%s247 + $0x38] sm:$0xff] %vm756, %v747
      %765 = vst.msk [vmem:[%s247 + $0x40] sm:$0xff] %vm756, %v749
      %766 = vst.msk [vmem:[%s247 + $0x48] sm:$0xff] %vm756, %v751
      %767 = vst.msk [vmem:[%s247 + $0x50] sm:$0xff] %vm756, %v753
      %768 = vst.msk [vmem:[%s247 + $0x58] sm:$0xff] %vm756, %v755
      %770 = vset.pattern.permute.xlu0 0
      %771 = vperm.xlu0 %770, %v733
      %v772 = vpop.permute.xlu0 %771
      %775 = vset.pattern.permute.xlu0 0
      %776 = vperm.xlu0 %775, %v735
      %v777 = vpop.permute.xlu0 %776
      %780 = vset.pattern.permute.xlu0 0
      %781 = vperm.xlu0 %780, %v737
      %v782 = vpop.permute.xlu0 %781
      %785 = vset.pattern.permute.xlu0 0
      %786 = vperm.xlu0 %785, %v739
      %v787 = vpop.permute.xlu0 %786
      %790 = vset.pattern.permute.xlu0 0
      %791 = vperm.xlu0 %790, %v741
      %v792 = vpop.permute.xlu0 %791
      %795 = vset.pattern.permute.xlu0 0
      %796 = vperm.xlu0 %795, %v743
      %v797 = vpop.permute.xlu0 %796
      %800 = vset.pattern.permute.xlu0 0
      %801 = vperm.xlu0 %800, %v745
      %v802 = vpop.permute.xlu0 %801
      %805 = vset.pattern.permute.xlu0 0
      %806 = vperm.xlu0 %805, %v747
      %v807 = vpop.permute.xlu0 %806
      %810 = vset.pattern.permute.xlu0 0
      %811 = vperm.xlu0 %810, %v749
      %v812 = vpop.permute.xlu0 %811
      %815 = vset.pattern.permute.xlu0 0
      %816 = vperm.xlu0 %815, %v751
      %v817 = vpop.permute.xlu0 %816
      %820 = vset.pattern.permute.xlu0 0
      %821 = vperm.xlu0 %820, %v753
      %v822 = vpop.permute.xlu0 %821
      %825 = vset.pattern.permute.xlu0 0
      %826 = vperm.xlu0 %825, %v755
      %v827 = vpop.permute.xlu0 %826
      %v829 = vmul.f32 %v294, %v772
      %v830 = vmul.f32 %v295, %v772
      %v831 = vmul.f32 %v296, %v777
      %v832 = vmul.f32 %v297, %v777
      %v833 = vmul.f32 %v298, %v782
      %v834 = vmul.f32 %v299, %v782
      %v835 = vmul.f32 %v300, %v787
      %v836 = vmul.f32 %v301, %v787
      %v837 = vmul.f32 %v302, %v792
      %v838 = vmul.f32 %v303, %v792
      %v839 = vmul.f32 %v304, %v797
      %v840 = vmul.f32 %v305, %v797
      %v841 = vmul.f32 %v306, %v802
      %v842 = vmul.f32 %v307, %v802
      %v843 = vmul.f32 %v308, %v807
      %v844 = vmul.f32 %v309, %v807
      %v845 = vmul.f32 %v310, %v812
      %v846 = vmul.f32 %v311, %v812
      %v847 = vmul.f32 %v312, %v817
      %v848 = vmul.f32 %v313, %v817
      %v849 = vmul.f32 %v314, %v822
      %v850 = vmul.f32 %v315, %v822
      %v851 = vmul.f32 %v316, %v827
      %v852 = vmul.f32 %v317, %v827
      %853 = vst [vmem:[%s240] sm:$0xff] %v829
      %854 = vst [vmem:[%s240 + $0x8] sm:$0xff] %v830
      %855 = vst [vmem:[%s240 + $0x10] sm:$0xff] %v831
      %856 = vst [vmem:[%s240 + $0x18] sm:$0xff] %v832
      %857 = vst [vmem:[%s240 + $0x20] sm:$0xff] %v833
      %858 = vst [vmem:[%s240 + $0x28] sm:$0xff] %v834
      %859 = vst [vmem:[%s240 + $0x30] sm:$0xff] %v835
      %860 = vst [vmem:[%s240 + $0x38] sm:$0xff] %v836
      %861 = vst [vmem:[%s240 + $0x40] sm:$0xff] %v837
      %862 = vst [vmem:[%s240 + $0x48] sm:$0xff] %v838
      %863 = vst [vmem:[%s240 + $0x50] sm:$0xff] %v839
      %864 = vst [vmem:[%s240 + $0x58] sm:$0xff] %v840
      %865 = vst [vmem:[%s240 + $0x60] sm:$0xff] %v841
      %866 = vst [vmem:[%s240 + $0x68] sm:$0xff] %v842
      %867 = vst [vmem:[%s240 + $0x70] sm:$0xff] %v843
      %868 = vst [vmem:[%s240 + $0x78] sm:$0xff] %v844
      %869 = vst [vmem:[%s240 + $0x80] sm:$0xff] %v845
      %870 = vst [vmem:[%s240 + $0x88] sm:$0xff] %v846
      %871 = vst [vmem:[%s240 + $0x90] sm:$0xff] %v847
      %872 = vst [vmem:[%s240 + $0x98] sm:$0xff] %v848
      %873 = vst [vmem:[%s240 + $0xa0] sm:$0xff] %v849
      %874 = vst [vmem:[%s240 + $0xa8] sm:$0xff] %v850
      %875 = vst [vmem:[%s240 + $0xb0] sm:$0xff] %v851
      %876 = vst [vmem:[%s240 + $0xb8] sm:$0xff] %v852
      %s877 = scalar_lea.vmem %s233, 192
      %v878 = vld [vmem:[%s877] sm:$0xff]
      %v879 = vld [vmem:[%s877 + $0x8] sm:$0xff]
      %v880 = vld [vmem:[%s877 + $0x10] sm:$0xff]
      %v881 = vld [vmem:[%s877 + $0x18] sm:$0xff]
      %v882 = vld [vmem:[%s877 + $0x20] sm:$0xff]
      %v883 = vld [vmem:[%s877 + $0x28] sm:$0xff]
      %v884 = vld [vmem:[%s877 + $0x30] sm:$0xff]
      %v885 = vld [vmem:[%s877 + $0x38] sm:$0xff]
      %v886 = vld [vmem:[%s877 + $0x40] sm:$0xff]
      %v887 = vld [vmem:[%s877 + $0x48] sm:$0xff]
      %v888 = vld [vmem:[%s877 + $0x50] sm:$0xff]
      %v889 = vld [vmem:[%s877 + $0x58] sm:$0xff]
      %v890 = vld [vmem:[%s877 + $0x60] sm:$0xff]
      %v891 = vld [vmem:[%s877 + $0x68] sm:$0xff]
      %v892 = vld [vmem:[%s877 + $0x70] sm:$0xff]
      %v893 = vld [vmem:[%s877 + $0x78] sm:$0xff]
      %v894 = vld [vmem:[%s877 + $0x80] sm:$0xff]
      %v895 = vld [vmem:[%s877 + $0x88] sm:$0xff]
      %v896 = vld [vmem:[%s877 + $0x90] sm:$0xff]
      %v897 = vld [vmem:[%s877 + $0x98] sm:$0xff]
      %v898 = vld [vmem:[%s877 + $0xa0] sm:$0xff]
      %v899 = vld [vmem:[%s877 + $0xa8] sm:$0xff]
      %v900 = vld [vmem:[%s877 + $0xb0] sm:$0xff]
      %v901 = vld [vmem:[%s877 + $0xb8] sm:$0xff]
      %902 = vmatprep.subr.mxu0 0.0
      %903 = vmatpush1.msra.mxu0 %v277
      %904 = vmatprep.subr.mxu0 0.0
      %905 = vmatpush1.msra.mxu0 %v276
      %906 = vmatprep.subr.mxu0 0.0
      %907 = vmatpush1.msra.mxu0 %v275
      %908 = vmatprep.subr.mxu0 0.0
      %909 = vmatpush1.msra.mxu0 %v274
      %910 = vmatprep.subr.mxu0 0.0
      %911 = vmatpush1.msra.mxu0 %v273
      %912 = vmatprep.subr.mxu0 0.0
      %913 = vmatpush1.msra.mxu0 %v272
      %914 = vmatprep.subr.mxu0 0.0
      %915 = vmatpush1.msra.mxu0 %v271
      %916 = vmatprep.subr.mxu0 0.0
      %917 = vmatpush1.msra.mxu0 %v270
      %918 = vmatprep.subr.mxu0 0.0
      %919 = vmatpush1.msra.mxu0 %v269
      %920 = vmatprep.subr.mxu0 0.0
      %921 = vmatpush1.msra.mxu0 %v268
      %922 = vmatprep.subr.mxu0 0.0
      %923 = vmatpush1.msra.mxu0 %v267
      %924 = vmatprep.subr.mxu0 0.0
      %925 = vmatpush1.msra.mxu0 %v266
      %926 = vmatprep.subr.mxu0 0.0
      %927 = vmatpush1.msra.mxu0 %v265
      %928 = vmatprep.subr.mxu0 0.0
      %929 = vmatpush1.msra.mxu0 %v264
      %930 = vmatprep.subr.mxu0 0.0
      %931 = vmatpush1.msra.mxu0 %v263
      %932 = vmatprep.subr.mxu0 0.0
      %933 = vmatpush1.msra.mxu0 %v262
      %934 = vmatprep.subr.mxu0 0.0
      %935 = vmatpush2.msra.mxu0 %v293
      %936 = vmatprep.subr.mxu0 0.0
      %937 = vmatpush2.msra.mxu0 %v292
      %938 = vmatprep.subr.mxu0 0.0
      %939 = vmatpush2.msra.mxu0 %v291
      %940 = vmatprep.subr.mxu0 0.0
      %941 = vmatpush2.msra.mxu0 %v290
      %942 = vmatprep.subr.mxu0 0.0
      %943 = vmatpush2.msra.mxu0 %v289
      %944 = vmatprep.subr.mxu0 0.0
      %945 = vmatpush2.msra.mxu0 %v288
      %946 = vmatprep.subr.mxu0 0.0
      %947 = vmatpush2.msra.mxu0 %v287
      %948 = vmatprep.subr.mxu0 0.0
      %949 = vmatpush2.msra.mxu0 %v286
      %950 = vmatprep.subr.mxu0 0.0
      %951 = vmatpush2.msra.mxu0 %v285
      %952 = vmatprep.subr.mxu0 0.0
      %953 = vmatpush2.msra.mxu0 %v284
      %954 = vmatprep.subr.mxu0 0.0
      %955 = vmatpush2.msra.mxu0 %v283
      %956 = vmatprep.subr.mxu0 0.0
      %957 = vmatpush2.msra.mxu0 %v282
      %958 = vmatprep.subr.mxu0 0.0
      %959 = vmatpush2.msra.mxu0 %v281
      %960 = vmatprep.subr.mxu0 0.0
      %961 = vmatpush2.msra.mxu0 %v280
      %962 = vmatprep.subr.mxu0 0.0
      %963 = vmatpush2.msra.mxu0 %v279
      %964 = vmatprep.subr.mxu0 0.0
      %965 = vmatpush2.msra.mxu0 %v278
      %966 = vmatprep.mubr.f32.mxu0 %v879
      %967 = vmatmul.mubr.f32.gmra.mxu0 %v878
      %v968 = vpop.f32.mrf.mxu0
      %v969 = vadd.f32 0.0, %v968
      %v970 = vpop.f32.mrf.mxu0
      %971 = vmatprep.mubr.f32.mxu0 %v881
      %972 = vmatmul.mubr.f32.gmra.mxu0 %v880
      %v973 = vpop.f32.mrf.mxu0
      %v974 = vadd.f32 0.0, %v973
      %v975 = vpop.f32.mrf.mxu0
      %976 = vmatprep.mubr.f32.mxu0 %v883
      %977 = vmatmul.mubr.f32.gmra.mxu0 %v882
      %v978 = vpop.f32.mrf.mxu0
      %v979 = vadd.f32 0.0, %v978
      %v980 = vpop.f32.mrf.mxu0
      %981 = vmatprep.mubr.f32.mxu0 %v885
      %982 = vmatmul.mubr.f32.gmra.mxu0 %v884
      %v983 = vpop.f32.mrf.mxu0
      %v984 = vadd.f32 0.0, %v983
      %v985 = vpop.f32.mrf.mxu0
      %986 = vmatprep.mubr.f32.mxu0 %v887
      %987 = vmatmul.mubr.f32.gmra.mxu0 %v886
      %v988 = vpop.f32.mrf.mxu0
      %v989 = vadd.f32 0.0, %v988
      %v990 = vpop.f32.mrf.mxu0
      %991 = vmatprep.mubr.f32.mxu0 %v889
      %992 = vmatmul.mubr.f32.gmra.mxu0 %v888
      %v993 = vpop.f32.mrf.mxu0
      %v994 = vadd.f32 0.0, %v993
      %v995 = vpop.f32.mrf.mxu0
      %996 = vmatprep.mubr.f32.mxu0 %v891
      %997 = vmatmul.mubr.f32.gmra.mxu0 %v890
      %v998 = vpop.f32.mrf.mxu0
      %v999 = vadd.f32 0.0, %v998
      %v1000 = vpop.f32.mrf.mxu0
      %1001 = vmatprep.mubr.f32.mxu0 %v893
      %1002 = vmatmul.mubr.f32.gmra.mxu0 %v892
      %v1003 = vpop.f32.mrf.mxu0
      %v1004 = vadd.f32 0.0, %v1003
      %v1005 = vpop.f32.mrf.mxu0
      %1006 = vmatprep.mubr.f32.mxu0 %v895
      %1007 = vmatmul.mubr.f32.gmra.mxu0 %v894
      %v1008 = vpop.f32.mrf.mxu0
      %v1009 = vadd.f32 0.0, %v1008
      %v1010 = vpop.f32.mrf.mxu0
      %1011 = vmatprep.mubr.f32.mxu0 %v897
      %1012 = vmatmul.mubr.f32.gmra.mxu0 %v896
      %v1013 = vpop.f32.mrf.mxu0
      %v1014 = vadd.f32 0.0, %v1013
      %v1015 = vpop.f32.mrf.mxu0
      %1016 = vmatprep.mubr.f32.mxu0 %v899
      %1017 = vmatmul.mubr.f32.gmra.mxu0 %v898
      %v1018 = vpop.f32.mrf.mxu0
      %v1019 = vadd.f32 0.0, %v1018
      %v1020 = vpop.f32.mrf.mxu0
      %1021 = vmatprep.mubr.f32.mxu0 %v901
      %1022 = vmatmul.mubr.f32.gmra.mxu0 %v900
      %v1023 = vpop.f32.mrf.mxu0
      %v1024 = vadd.f32 0.0, %v1023
      %v1025 = vpop.f32.mrf.mxu0
      %1026 = vdwg.mxu0
      %1027 = vmatprep.subr.mxu0 0.0
      %1028 = vmatpush1.msra.mxu0 0.0
      %1029 = vmatprep.subr.mxu0 0.0
      %1030 = vmatpush1.msra.mxu0 0.0
      %1031 = vmatprep.subr.mxu0 0.0
      %1032 = vmatpush1.msra.mxu0 0.0
      %1033 = vmatprep.subr.mxu0 0.0
      %1034 = vmatpush1.msra.mxu0 0.0
      %1035 = vmatprep.subr.mxu0 0.0
      %1036 = vmatpush1.msra.mxu0 %v1024
      %1037 = vmatprep.subr.mxu0 0.0
      %1038 = vmatpush1.msra.mxu0 %v1019
      %1039 = vmatprep.subr.mxu0 0.0
      %1040 = vmatpush1.msra.mxu0 %v1014
      %1041 = vmatprep.subr.mxu0 0.0
      %1042 = vmatpush1.msra.mxu0 %v1009
      %1043 = vmatprep.subr.mxu0 0.0
      %1044 = vmatpush1.msra.mxu0 %v1004
      %1045 = vmatprep.subr.mxu0 0.0
      %1046 = vmatpush1.msra.mxu0 %v999
      %1047 = vmatprep.subr.mxu0 0.0
      %1048 = vmatpush1.msra.mxu0 %v994
      %1049 = vmatprep.subr.mxu0 0.0
      %1050 = vmatpush1.msra.mxu0 %v989
      %1051 = vmatprep.subr.mxu0 0.0
      %1052 = vmatpush1.msra.mxu0 %v984
      %1053 = vmatprep.subr.mxu0 0.0
      %1054 = vmatpush1.msra.mxu0 %v979
      %1055 = vmatprep.subr.mxu0 0.0
      %1056 = vmatpush1.msra.mxu0 %v974
      %1057 = vmatprep.subr.mxu0 0.0
      %1058 = vmatpush1.msra.mxu0 %v969
      %1059 = vmatprep.subr.mxu0 0.0
      %1060 = vmatpush2.msra.mxu0 0.0
      %1061 = vmatprep.subr.mxu0 0.0
      %1062 = vmatpush2.msra.mxu0 0.0
      %1063 = vmatprep.subr.mxu0 0.0
      %1064 = vmatpush2.msra.mxu0 0.0
      %1065 = vmatprep.subr.mxu0 0.0
      %1066 = vmatpush2.msra.mxu0 0.0
      %1067 = vmatprep.subr.mxu0 0.0
      %1068 = vmatpush2.msra.mxu0 0.0
      %1069 = vmatprep.subr.mxu0 0.0
      %1070 = vmatpush2.msra.mxu0 0.0
      %1071 = vmatprep.subr.mxu0 0.0
      %1072 = vmatpush2.msra.mxu0 0.0
      %1073 = vmatprep.subr.mxu0 0.0
      %1074 = vmatpush2.msra.mxu0 0.0
      %1075 = vmatprep.subr.mxu0 0.0
      %1076 = vmatpush2.msra.mxu0 0.0
      %1077 = vmatprep.subr.mxu0 0.0
      %1078 = vmatpush2.msra.mxu0 0.0
      %1079 = vmatprep.subr.mxu0 0.0
      %1080 = vmatpush2.msra.mxu0 0.0
      %1081 = vmatprep.subr.mxu0 0.0
      %1082 = vmatpush2.msra.mxu0 0.0
      %1083 = vmatprep.subr.mxu0 0.0
      %1084 = vmatpush2.msra.mxu0 0.0
      %1085 = vmatprep.subr.mxu0 0.0
      %1086 = vmatpush2.msra.mxu0 0.0
      %1087 = vmatprep.subr.mxu0 0.0
      %1088 = vmatpush2.msra.mxu0 0.0
      %1089 = vmatprep.subr.mxu0 0.0
      %1090 = vmatpush2.msra.mxu0 0.0
      %1091 = vmatprep.mubr.f32.mxu0 0.0
      %1092 = vmatmul.mubr.f32.gmra.mxu0 %v445
      %v1093 = vpop.f32.mrf.mxu0
      %v1094 = vadd.f32 0.0, %v1093
      %v1095 = vpop.f32.mrf.mxu0
      %1096 = vdwg.mxu0
      %v1097 = vmax.f32 %v1094, 0.0
      %v1099 = vsel %vm555, %v1097, 0
      %1101 = vmatprep.subr.mxu0 0.0
      %1102 = vmatpush1.msra.mxu0 0.0
      %1103 = vmatprep.subr.mxu0 0.0
      %1104 = vmatpush1.msra.mxu0 0.0
      %1105 = vmatprep.subr.mxu0 0.0
      %1106 = vmatpush1.msra.mxu0 0.0
      %1107 = vmatprep.subr.mxu0 0.0
      %1108 = vmatpush1.msra.mxu0 0.0
      %1109 = vmatprep.subr.mxu0 0.0
      %1110 = vmatpush1.msra.mxu0 0.0
      %1111 = vmatprep.subr.mxu0 0.0
      %1112 = vmatpush1.msra.mxu0 0.0
      %1113 = vmatprep.subr.mxu0 0.0
      %1114 = vmatpush1.msra.mxu0 0.0
      %1115 = vmatprep.subr.mxu0 0.0
      %1116 = vmatpush1.msra.mxu0 0.0
      %1117 = vmatprep.subr.mxu0 0.0
      %1118 = vmatpush1.msra.mxu0 0.0
      %1119 = vmatprep.subr.mxu0 0.0
      %1120 = vmatpush1.msra.mxu0 0.0
      %1121 = vmatprep.subr.mxu0 0.0
      %1122 = vmatpush1.msra.mxu0 0.0
      %1123 = vmatprep.subr.mxu0 0.0
      %1124 = vmatpush1.msra.mxu0 0.0
      %1125 = vmatprep.subr.mxu0 0.0
      %1126 = vmatpush1.msra.mxu0 0.0
      %1127 = vmatprep.subr.mxu0 0.0
      %1128 = vmatpush1.msra.mxu0 0.0
      %1129 = vmatprep.subr.mxu0 0.0
      %1130 = vmatpush1.msra.mxu0 0.0
      %1131 = vmatprep.subr.mxu0 0.0
      %1132 = vmatpush1.msra.mxu0 %v1099
      %1133 = vmatprep.subr.mxu0 0.0
      %1134 = vmatpush2.msra.mxu0 0.0
      %1135 = vmatprep.subr.mxu0 0.0
      %1136 = vmatpush2.msra.mxu0 0.0
      %1137 = vmatprep.subr.mxu0 0.0
      %1138 = vmatpush2.msra.mxu0 0.0
      %1139 = vmatprep.subr.mxu0 0.0
      %1140 = vmatpush2.msra.mxu0 0.0
      %1141 = vmatprep.subr.mxu0 0.0
      %1142 = vmatpush2.msra.mxu0 0.0
      %1143 = vmatprep.subr.mxu0 0.0
      %1144 = vmatpush2.msra.mxu0 0.0
      %1145 = vmatprep.subr.mxu0 0.0
      %1146 = vmatpush2.msra.mxu0 0.0
      %1147 = vmatprep.subr.mxu0 0.0
      %1148 = vmatpush2.msra.mxu0 0.0
      %1149 = vmatprep.subr.mxu0 0.0
      %1150 = vmatpush2.msra.mxu0 0.0
      %1151 = vmatprep.subr.mxu0 0.0
      %1152 = vmatpush2.msra.mxu0 0.0
      %1153 = vmatprep.subr.mxu0 0.0
      %1154 = vmatpush2.msra.mxu0 0.0
      %1155 = vmatprep.subr.mxu0 0.0
      %1156 = vmatpush2.msra.mxu0 0.0
      %1157 = vmatprep.subr.mxu0 0.0
      %1158 = vmatpush2.msra.mxu0 0.0
      %1159 = vmatprep.subr.mxu0 0.0
      %1160 = vmatpush2.msra.mxu0 0.0
      %1161 = vmatprep.subr.mxu0 0.0
      %1162 = vmatpush2.msra.mxu0 0.0
      %1163 = vmatprep.subr.mxu0 0.0
      %1164 = vmatpush2.msra.mxu0 0.0
      %1165 = vmatprep.mubr.f32.mxu0 0.0
      %1166 = vmatmul.mubr.f32.gmra.mxu0 %v520
      %v1167 = vpop.f32.mrf.mxu0
      %v1168 = vadd.f32 0.0, %v1167
      %v1169 = vpop.f32.mrf.mxu0
      %1170 = vmatprep.mubr.f32.mxu0 0.0
      %1171 = vmatmul.mubr.f32.gmra.mxu0 %v523
      %v1172 = vpop.f32.mrf.mxu0
      %v1173 = vadd.f32 0.0, %v1172
      %v1174 = vpop.f32.mrf.mxu0
      %1175 = vmatprep.mubr.f32.mxu0 0.0
      %1176 = vmatmul.mubr.f32.gmra.mxu0 %v526
      %v1177 = vpop.f32.mrf.mxu0
      %v1178 = vadd.f32 0.0, %v1177
      %v1179 = vpop.f32.mrf.mxu0
      %1180 = vmatprep.mubr.f32.mxu0 0.0
      %1181 = vmatmul.mubr.f32.gmra.mxu0 %v529
      %v1182 = vpop.f32.mrf.mxu0
      %v1183 = vadd.f32 0.0, %v1182
      %v1184 = vpop.f32.mrf.mxu0
      %1185 = vmatprep.mubr.f32.mxu0 0.0
      %1186 = vmatmul.mubr.f32.gmra.mxu0 %v532
      %v1187 = vpop.f32.mrf.mxu0
      %v1188 = vadd.f32 0.0, %v1187
      %v1189 = vpop.f32.mrf.mxu0
      %1190 = vmatprep.mubr.f32.mxu0 0.0
      %1191 = vmatmul.mubr.f32.gmra.mxu0 %v535
      %v1192 = vpop.f32.mrf.mxu0
      %v1193 = vadd.f32 0.0, %v1192
      %v1194 = vpop.f32.mrf.mxu0
      %1195 = vmatprep.mubr.f32.mxu0 0.0
      %1196 = vmatmul.mubr.f32.gmra.mxu0 %v538
      %v1197 = vpop.f32.mrf.mxu0
      %v1198 = vadd.f32 0.0, %v1197
      %v1199 = vpop.f32.mrf.mxu0
      %1200 = vmatprep.mubr.f32.mxu0 0.0
      %1201 = vmatmul.mubr.f32.gmra.mxu0 %v541
      %v1202 = vpop.f32.mrf.mxu0
      %v1203 = vadd.f32 0.0, %v1202
      %v1204 = vpop.f32.mrf.mxu0
      %1205 = vmatprep.mubr.f32.mxu0 0.0
      %1206 = vmatmul.mubr.f32.gmra.mxu0 %v544
      %v1207 = vpop.f32.mrf.mxu0
      %v1208 = vadd.f32 0.0, %v1207
      %v1209 = vpop.f32.mrf.mxu0
      %1210 = vmatprep.mubr.f32.mxu0 0.0
      %1211 = vmatmul.mubr.f32.gmra.mxu0 %v547
      %v1212 = vpop.f32.mrf.mxu0
      %v1213 = vadd.f32 0.0, %v1212
      %v1214 = vpop.f32.mrf.mxu0
      %1215 = vmatprep.mubr.f32.mxu0 0.0
      %1216 = vmatmul.mubr.f32.gmra.mxu0 %v550
      %v1217 = vpop.f32.mrf.mxu0
      %v1218 = vadd.f32 0.0, %v1217
      %v1219 = vpop.f32.mrf.mxu0
      %1220 = vmatprep.mubr.f32.mxu0 0.0
      %1221 = vmatmul.mubr.f32.gmra.mxu0 %v553
      %v1222 = vpop.f32.mrf.mxu0
      %v1223 = vadd.f32 0.0, %v1222
      %v1224 = vpop.f32.mrf.mxu0
      %1225 = vdwg.mxu0
      %v1226 = vxor.u32 %v1168, 2147483648
      %v1227 = vxor.u32 %v1173, 2147483648
      %v1228 = vxor.u32 %v1178, 2147483648
      %v1229 = vxor.u32 %v1183, 2147483648
      %v1230 = vxor.u32 %v1188, 2147483648
      %v1231 = vxor.u32 %v1193, 2147483648
      %v1232 = vxor.u32 %v1198, 2147483648
      %v1233 = vxor.u32 %v1203, 2147483648
      %v1234 = vxor.u32 %v1208, 2147483648
      %v1235 = vxor.u32 %v1213, 2147483648
      %v1236 = vxor.u32 %v1218, 2147483648
      %v1237 = vxor.u32 %v1223, 2147483648
      %v1238 = vmul.f32 %v1226, 1.442695
      %v1239 = vpow.pop %v1238
      %v1240 = vmul.f32 %v1227, 1.442695
      %v1241 = vpow.pop %v1240
      %v1242 = vmul.f32 %v1228, 1.442695
      %v1243 = vpow.pop %v1242
      %v1244 = vmul.f32 %v1229, 1.442695
      %v1245 = vpow.pop %v1244
      %v1246 = vmul.f32 %v1230, 1.442695
      %v1247 = vpow.pop %v1246
      %v1248 = vmul.f32 %v1231, 1.442695
      %v1249 = vpow.pop %v1248
      %v1250 = vmul.f32 %v1232, 1.442695
      %v1251 = vpow.pop %v1250
      %v1252 = vmul.f32 %v1233, 1.442695
      %v1253 = vpow.pop %v1252
      %v1254 = vmul.f32 %v1234, 1.442695
      %v1255 = vpow.pop %v1254
      %v1256 = vmul.f32 %v1235, 1.442695
      %v1257 = vpow.pop %v1256
      %v1258 = vmul.f32 %v1236, 1.442695
      %v1259 = vpow.pop %v1258
      %v1260 = vmul.f32 %v1237, 1.442695
      %v1261 = vpow.pop %v1260
      %v1262 = vadd.f32 %v1239, 1.0
      %v1263 = vadd.f32 %v1241, 1.0
      %v1264 = vadd.f32 %v1243, 1.0
      %v1265 = vadd.f32 %v1245, 1.0
      %v1266 = vadd.f32 %v1247, 1.0
      %v1267 = vadd.f32 %v1249, 1.0
      %v1268 = vadd.f32 %v1251, 1.0
      %v1269 = vadd.f32 %v1253, 1.0
      %v1270 = vadd.f32 %v1255, 1.0
      %v1271 = vadd.f32 %v1257, 1.0
      %v1272 = vadd.f32 %v1259, 1.0
      %v1273 = vadd.f32 %v1261, 1.0
      %v1274 = vrcp.pop %v1262
      %v1275 = vmul.f32 1.0, %v1274
      %v1276 = vrcp.pop %v1263
      %v1277 = vmul.f32 1.0, %v1276
      %v1278 = vrcp.pop %v1264
      %v1279 = vmul.f32 1.0, %v1278
      %v1280 = vrcp.pop %v1265
      %v1281 = vmul.f32 1.0, %v1280
      %v1282 = vrcp.pop %v1266
      %v1283 = vmul.f32 1.0, %v1282
      %v1284 = vrcp.pop %v1267
      %v1285 = vmul.f32 1.0, %v1284
      %v1286 = vrcp.pop %v1268
      %v1287 = vmul.f32 1.0, %v1286
      %v1288 = vrcp.pop %v1269
      %v1289 = vmul.f32 1.0, %v1288
      %v1290 = vrcp.pop %v1270
      %v1291 = vmul.f32 1.0, %v1290
      %v1292 = vrcp.pop %v1271
      %v1293 = vmul.f32 1.0, %v1292
      %v1294 = vrcp.pop %v1272
      %v1295 = vmul.f32 1.0, %v1294
      %v1296 = vrcp.pop %v1273
      %v1297 = vmul.f32 1.0, %v1296
      %s1298 = scalar_lea.vmem %s247, 96
      %1299 = vst.msk [vmem:[%s1298] sm:$0xff] %vm756, %v1275
      %1300 = vst.msk [vmem:[%s1298 + $0x8] sm:$0xff] %vm756, %v1277
      %1301 = vst.msk [vmem:[%s1298 + $0x10] sm:$0xff] %vm756, %v1279
      %1302 = vst.msk [vmem:[%s1298 + $0x18] sm:$0xff] %vm756, %v1281
      %1303 = vst.msk [vmem:[%s1298 + $0x20] sm:$0xff] %vm756, %v1283
      %1304 = vst.msk [vmem:[%s1298 + $0x28] sm:$0xff] %vm756, %v1285
      %1305 = vst.msk [vmem:[%s1298 + $0x30] sm:$0xff] %vm756, %v1287
      %1306 = vst.msk [vmem:[%s1298 + $0x38] sm:$0xff] %vm756, %v1289
      %1307 = vst.msk [vmem:[%s1298 + $0x40] sm:$0xff] %vm756, %v1291
      %1308 = vst.msk [vmem:[%s1298 + $0x48] sm:$0xff] %vm756, %v1293
      %1309 = vst.msk [vmem:[%s1298 + $0x50] sm:$0xff] %vm756, %v1295
      %1310 = vst.msk [vmem:[%s1298 + $0x58] sm:$0xff] %vm756, %v1297
      %1312 = vset.pattern.permute.xlu0 0
      %1313 = vperm.xlu0 %1312, %v1275
      %v1314 = vpop.permute.xlu0 %1313
      %1317 = vset.pattern.permute.xlu0 0
      %1318 = vperm.xlu0 %1317, %v1277
      %v1319 = vpop.permute.xlu0 %1318
      %1322 = vset.pattern.permute.xlu0 0
      %1323 = vperm.xlu0 %1322, %v1279
      %v1324 = vpop.permute.xlu0 %1323
      %1327 = vset.pattern.permute.xlu0 0
      %1328 = vperm.xlu0 %1327, %v1281
      %v1329 = vpop.permute.xlu0 %1328
      %1332 = vset.pattern.permute.xlu0 0
      %1333 = vperm.xlu0 %1332, %v1283
      %v1334 = vpop.permute.xlu0 %1333
      %1337 = vset.pattern.permute.xlu0 0
      %1338 = vperm.xlu0 %1337, %v1285
      %v1339 = vpop.permute.xlu0 %1338
      %1342 = vset.pattern.permute.xlu0 0
      %1343 = vperm.xlu0 %1342, %v1287
      %v1344 = vpop.permute.xlu0 %1343
      %1347 = vset.pattern.permute.xlu0 0
      %1348 = vperm.xlu0 %1347, %v1289
      %v1349 = vpop.permute.xlu0 %1348
      %1352 = vset.pattern.permute.xlu0 0
      %1353 = vperm.xlu0 %1352, %v1291
      %v1354 = vpop.permute.xlu0 %1353
      %1357 = vset.pattern.permute.xlu0 0
      %1358 = vperm.xlu0 %1357, %v1293
      %v1359 = vpop.permute.xlu0 %1358
      %1362 = vset.pattern.permute.xlu0 0
      %1363 = vperm.xlu0 %1362, %v1295
      %v1364 = vpop.permute.xlu0 %1363
      %1367 = vset.pattern.permute.xlu0 0
      %1368 = vperm.xlu0 %1367, %v1297
      %v1369 = vpop.permute.xlu0 %1368
      %v1371 = vmul.f32 %v878, %v1314
      %v1372 = vmul.f32 %v879, %v1314
      %v1373 = vmul.f32 %v880, %v1319
      %v1374 = vmul.f32 %v881, %v1319
      %v1375 = vmul.f32 %v882, %v1324
      %v1376 = vmul.f32 %v883, %v1324
      %v1377 = vmul.f32 %v884, %v1329
      %v1378 = vmul.f32 %v885, %v1329
      %v1379 = vmul.f32 %v886, %v1334
      %v1380 = vmul.f32 %v887, %v1334
      %v1381 = vmul.f32 %v888, %v1339
      %v1382 = vmul.f32 %v889, %v1339
      %v1383 = vmul.f32 %v890, %v1344
      %v1384 = vmul.f32 %v891, %v1344
      %v1385 = vmul.f32 %v892, %v1349
      %v1386 = vmul.f32 %v893, %v1349
      %v1387 = vmul.f32 %v894, %v1354
      %v1388 = vmul.f32 %v895, %v1354
      %v1389 = vmul.f32 %v896, %v1359
      %v1390 = vmul.f32 %v897, %v1359
      %v1391 = vmul.f32 %v898, %v1364
      %v1392 = vmul.f32 %v899, %v1364
      %v1393 = vmul.f32 %v900, %v1369
      %v1394 = vmul.f32 %v901, %v1369
      %s1395 = scalar_lea.vmem %s240, 192
      %1396 = vst [vmem:[%s1395] sm:$0xff] %v1371
      %1397 = vst [vmem:[%s1395 + $0x8] sm:$0xff] %v1372
      %1398 = vst [vmem:[%s1395 + $0x10] sm:$0xff] %v1373
      %1399 = vst [vmem:[%s1395 + $0x18] sm:$0xff] %v1374
      %1400 = vst [vmem:[%s1395 + $0x20] sm:$0xff] %v1375
      %1401 = vst [vmem:[%s1395 + $0x28] sm:$0xff] %v1376
      %1402 = vst [vmem:[%s1395 + $0x30] sm:$0xff] %v1377
      %1403 = vst [vmem:[%s1395 + $0x38] sm:$0xff] %v1378
      %1404 = vst [vmem:[%s1395 + $0x40] sm:$0xff] %v1379
      %1405 = vst [vmem:[%s1395 + $0x48] sm:$0xff] %v1380
      %1406 = vst [vmem:[%s1395 + $0x50] sm:$0xff] %v1381
      %1407 = vst [vmem:[%s1395 + $0x58] sm:$0xff] %v1382
      %1408 = vst [vmem:[%s1395 + $0x60] sm:$0xff] %v1383
      %1409 = vst [vmem:[%s1395 + $0x68] sm:$0xff] %v1384
      %1410 = vst [vmem:[%s1395 + $0x70] sm:$0xff] %v1385
      %1411 = vst [vmem:[%s1395 + $0x78] sm:$0xff] %v1386
      %1412 = vst [vmem:[%s1395 + $0x80] sm:$0xff] %v1387
      %1413 = vst [vmem:[%s1395 + $0x88] sm:$0xff] %v1388
      %1414 = vst [vmem:[%s1395 + $0x90] sm:$0xff] %v1389
      %1415 = vst [vmem:[%s1395 + $0x98] sm:$0xff] %v1390
      %1416 = vst [vmem:[%s1395 + $0xa0] sm:$0xff] %v1391
      %1417 = vst [vmem:[%s1395 + $0xa8] sm:$0xff] %v1392
      %1418 = vst [vmem:[%s1395 + $0xb0] sm:$0xff] %v1393
      %1419 = vst [vmem:[%s1395 + $0xb8] sm:$0xff] %v1394
      %s1420 = scalar_lea.vmem %s233, 384
      %v1421 = vld [vmem:[%s1420] sm:$0xff]
      %v1422 = vld [vmem:[%s1420 + $0x8] sm:$0xff]
      %v1423 = vld [vmem:[%s1420 + $0x10] sm:$0xff]
      %v1424 = vld [vmem:[%s1420 + $0x18] sm:$0xff]
      %v1425 = vld [vmem:[%s1420 + $0x20] sm:$0xff]
      %v1426 = vld [vmem:[%s1420 + $0x28] sm:$0xff]
      %v1427 = vld [vmem:[%s1420 + $0x30] sm:$0xff]
      %v1428 = vld [vmem:[%s1420 + $0x38] sm:$0xff]
      %v1429 = vld [vmem:[%s1420 + $0x40] sm:$0xff]
      %v1430 = vld [vmem:[%s1420 + $0x48] sm:$0xff]
      %v1431 = vld [vmem:[%s1420 + $0x50] sm:$0xff]
      %v1432 = vld [vmem:[%s1420 + $0x58] sm:$0xff]
      %v1433 = vld [vmem:[%s1420 + $0x60] sm:$0xff]
      %v1434 = vld [vmem:[%s1420 + $0x68] sm:$0xff]
      %v1435 = vld [vmem:[%s1420 + $0x70] sm:$0xff]
      %v1436 = vld [vmem:[%s1420 + $0x78] sm:$0xff]
      %v1437 = vld [vmem:[%s1420 + $0x80] sm:$0xff]
      %v1438 = vld [vmem:[%s1420 + $0x88] sm:$0xff]
      %v1439 = vld [vmem:[%s1420 + $0x90] sm:$0xff]
      %v1440 = vld [vmem:[%s1420 + $0x98] sm:$0xff]
      %v1441 = vld [vmem:[%s1420 + $0xa0] sm:$0xff]
      %v1442 = vld [vmem:[%s1420 + $0xa8] sm:$0xff]
      %v1443 = vld [vmem:[%s1420 + $0xb0] sm:$0xff]
      %v1444 = vld [vmem:[%s1420 + $0xb8] sm:$0xff]
      %1445 = vmatprep.subr.mxu0 0.0
      %1446 = vmatpush1.msra.mxu0 %v277
      %1447 = vmatprep.subr.mxu0 0.0
      %1448 = vmatpush1.msra.mxu0 %v276
      %1449 = vmatprep.subr.mxu0 0.0
      %1450 = vmatpush1.msra.mxu0 %v275
      %1451 = vmatprep.subr.mxu0 0.0
      %1452 = vmatpush1.msra.mxu0 %v274
      %1453 = vmatprep.subr.mxu0 0.0
      %1454 = vmatpush1.msra.mxu0 %v273
      %1455 = vmatprep.subr.mxu0 0.0
      %1456 = vmatpush1.msra.mxu0 %v272
      %1457 = vmatprep.subr.mxu0 0.0
      %1458 = vmatpush1.msra.mxu0 %v271
      %1459 = vmatprep.subr.mxu0 0.0
      %1460 = vmatpush1.msra.mxu0 %v270
      %1461 = vmatprep.subr.mxu0 0.0
      %1462 = vmatpush1.msra.mxu0 %v269
      %1463 = vmatprep.subr.mxu0 0.0
      %1464 = vmatpush1.msra.mxu0 %v268
      %1465 = vmatprep.subr.mxu0 0.0
      %1466 = vmatpush1.msra.mxu0 %v267
      %1467 = vmatprep.subr.mxu0 0.0
      %1468 = vmatpush1.msra.mxu0 %v266
      %1469 = vmatprep.subr.mxu0 0.0
      %1470 = vmatpush1.msra.mxu0 %v265
      %1471 = vmatprep.subr.mxu0 0.0
      %1472 = vmatpush1.msra.mxu0 %v264
      %1473 = vmatprep.subr.mxu0 0.0
      %1474 = vmatpush1.msra.mxu0 %v263
      %1475 = vmatprep.subr.mxu0 0.0
      %1476 = vmatpush1.msra.mxu0 %v262
      %1477 = vmatprep.subr.mxu0 0.0
      %1478 = vmatpush2.msra.mxu0 %v293
      %1479 = vmatprep.subr.mxu0 0.0
      %1480 = vmatpush2.msra.mxu0 %v292
      %1481 = vmatprep.subr.mxu0 0.0
      %1482 = vmatpush2.msra.mxu0 %v291
      %1483 = vmatprep.subr.mxu0 0.0
      %1484 = vmatpush2.msra.mxu0 %v290
      %1485 = vmatprep.subr.mxu0 0.0
      %1486 = vmatpush2.msra.mxu0 %v289
      %1487 = vmatprep.subr.mxu0 0.0
      %1488 = vmatpush2.msra.mxu0 %v288
      %1489 = vmatprep.subr.mxu0 0.0
      %1490 = vmatpush2.msra.mxu0 %v287
      %1491 = vmatprep.subr.mxu0 0.0
      %1492 = vmatpush2.msra.mxu0 %v286
      %1493 = vmatprep.subr.mxu0 0.0
      %1494 = vmatpush2.msra.mxu0 %v285
      %1495 = vmatprep.subr.mxu0 0.0
      %1496 = vmatpush2.msra.mxu0 %v284
      %1497 = vmatprep.subr.mxu0 0.0
      %1498 = vmatpush2.msra.mxu0 %v283
      %1499 = vmatprep.subr.mxu0 0.0
      %1500 = vmatpush2.msra.mxu0 %v282
      %1501 = vmatprep.subr.mxu0 0.0
      %1502 = vmatpush2.msra.mxu0 %v281
      %1503 = vmatprep.subr.mxu0 0.0
      %1504 = vmatpush2.msra.mxu0 %v280
      %1505 = vmatprep.subr.mxu0 0.0
      %1506 = vmatpush2.msra.mxu0 %v279
      %1507 = vmatprep.subr.mxu0 0.0
      %1508 = vmatpush2.msra.mxu0 %v278
      %1509 = vmatprep.mubr.f32.mxu0 %v1422
      %1510 = vmatmul.mubr.f32.gmra.mxu0 %v1421
      %v1511 = vpop.f32.mrf.mxu0
      %v1512 = vadd.f32 0.0, %v1511
      %v1513 = vpop.f32.mrf.mxu0
      %1514 = vmatprep.mubr.f32.mxu0 %v1424
      %1515 = vmatmul.mubr.f32.gmra.mxu0 %v1423
      %v1516 = vpop.f32.mrf.mxu0
      %v1517 = vadd.f32 0.0, %v1516
      %v1518 = vpop.f32.mrf.mxu0
      %1519 = vmatprep.mubr.f32.mxu0 %v1426
      %1520 = vmatmul.mubr.f32.gmra.mxu0 %v1425
      %v1521 = vpop.f32.mrf.mxu0
      %v1522 = vadd.f32 0.0, %v1521
      %v1523 = vpop.f32.mrf.mxu0
      %1524 = vmatprep.mubr.f32.mxu0 %v1428
      %1525 = vmatmul.mubr.f32.gmra.mxu0 %v1427
      %v1526 = vpop.f32.mrf.mxu0
      %v1527 = vadd.f32 0.0, %v1526
      %v1528 = vpop.f32.mrf.mxu0
      %1529 = vmatprep.mubr.f32.mxu0 %v1430
      %1530 = vmatmul.mubr.f32.gmra.mxu0 %v1429
      %v1531 = vpop.f32.mrf.mxu0
      %v1532 = vadd.f32 0.0, %v1531
      %v1533 = vpop.f32.mrf.mxu0
      %1534 = vmatprep.mubr.f32.mxu0 %v1432
      %1535 = vmatmul.mubr.f32.gmra.mxu0 %v1431
      %v1536 = vpop.f32.mrf.mxu0
      %v1537 = vadd.f32 0.0, %v1536
      %v1538 = vpop.f32.mrf.mxu0
      %1539 = vmatprep.mubr.f32.mxu0 %v1434
      %1540 = vmatmul.mubr.f32.gmra.mxu0 %v1433
      %v1541 = vpop.f32.mrf.mxu0
      %v1542 = vadd.f32 0.0, %v1541
      %v1543 = vpop.f32.mrf.mxu0
      %1544 = vmatprep.mubr.f32.mxu0 %v1436
      %1545 = vmatmul.mubr.f32.gmra.mxu0 %v1435
      %v1546 = vpop.f32.mrf.mxu0
      %v1547 = vadd.f32 0.0, %v1546
      %v1548 = vpop.f32.mrf.mxu0
      %1549 = vmatprep.mubr.f32.mxu0 %v1438
      %1550 = vmatmul.mubr.f32.gmra.mxu0 %v1437
      %v1551 = vpop.f32.mrf.mxu0
      %v1552 = vadd.f32 0.0, %v1551
      %v1553 = vpop.f32.mrf.mxu0
      %1554 = vmatprep.mubr.f32.mxu0 %v1440
      %1555 = vmatmul.mubr.f32.gmra.mxu0 %v1439
      %v1556 = vpop.f32.mrf.mxu0
      %v1557 = vadd.f32 0.0, %v1556
      %v1558 = vpop.f32.mrf.mxu0
      %1559 = vmatprep.mubr.f32.mxu0 %v1442
      %1560 = vmatmul.mubr.f32.gmra.mxu0 %v1441
      %v1561 = vpop.f32.mrf.mxu0
      %v1562 = vadd.f32 0.0, %v1561
      %v1563 = vpop.f32.mrf.mxu0
      %1564 = vmatprep.mubr.f32.mxu0 %v1444
      %1565 = vmatmul.mubr.f32.gmra.mxu0 %v1443
      %v1566 = vpop.f32.mrf.mxu0
      %v1567 = vadd.f32 0.0, %v1566
      %v1568 = vpop.f32.mrf.mxu0
      %1569 = vdwg.mxu0
      %1570 = vmatprep.subr.mxu0 0.0
      %1571 = vmatpush1.msra.mxu0 0.0
      %1572 = vmatprep.subr.mxu0 0.0
      %1573 = vmatpush1.msra.mxu0 0.0
      %1574 = vmatprep.subr.mxu0 0.0
      %1575 = vmatpush1.msra.mxu0 0.0
      %1576 = vmatprep.subr.mxu0 0.0
      %1577 = vmatpush1.msra.mxu0 0.0
      %1578 = vmatprep.subr.mxu0 0.0
      %1579 = vmatpush1.msra.mxu0 %v1567
      %1580 = vmatprep.subr.mxu0 0.0
      %1581 = vmatpush1.msra.mxu0 %v1562
      %1582 = vmatprep.subr.mxu0 0.0
      %1583 = vmatpush1.msra.mxu0 %v1557
      %1584 = vmatprep.subr.mxu0 0.0
      %1585 = vmatpush1.msra.mxu0 %v1552
      %1586 = vmatprep.subr.mxu0 0.0
      %1587 = vmatpush1.msra.mxu0 %v1547
      %1588 = vmatprep.subr.mxu0 0.0
      %1589 = vmatpush1.msra.mxu0 %v1542
      %1590 = vmatprep.subr.mxu0 0.0
      %1591 = vmatpush1.msra.mxu0 %v1537
      %1592 = vmatprep.subr.mxu0 0.0
      %1593 = vmatpush1.msra.mxu0 %v1532
      %1594 = vmatprep.subr.mxu0 0.0
      %1595 = vmatpush1.msra.mxu0 %v1527
      %1596 = vmatprep.subr.mxu0 0.0
      %1597 = vmatpush1.msra.mxu0 %v1522
      %1598 = vmatprep.subr.mxu0 0.0
      %1599 = vmatpush1.msra.mxu0 %v1517
      %1600 = vmatprep.subr.mxu0 0.0
      %1601 = vmatpush1.msra.mxu0 %v1512
      %1602 = vmatprep.subr.mxu0 0.0
      %1603 = vmatpush2.msra.mxu0 0.0
      %1604 = vmatprep.subr.mxu0 0.0
      %1605 = vmatpush2.msra.mxu0 0.0
      %1606 = vmatprep.subr.mxu0 0.0
      %1607 = vmatpush2.msra.mxu0 0.0
      %1608 = vmatprep.subr.mxu0 0.0
      %1609 = vmatpush2.msra.mxu0 0.0
      %1610 = vmatprep.subr.mxu0 0.0
      %1611 = vmatpush2.msra.mxu0 0.0
      %1612 = vmatprep.subr.mxu0 0.0
      %1613 = vmatpush2.msra.mxu0 0.0
      %1614 = vmatprep.subr.mxu0 0.0
      %1615 = vmatpush2.msra.mxu0 0.0
      %1616 = vmatprep.subr.mxu0 0.0
      %1617 = vmatpush2.msra.mxu0 0.0
      %1618 = vmatprep.subr.mxu0 0.0
      %1619 = vmatpush2.msra.mxu0 0.0
      %1620 = vmatprep.subr.mxu0 0.0
      %1621 = vmatpush2.msra.mxu0 0.0
      %1622 = vmatprep.subr.mxu0 0.0
      %1623 = vmatpush2.msra.mxu0 0.0
      %1624 = vmatprep.subr.mxu0 0.0
      %1625 = vmatpush2.msra.mxu0 0.0
      %1626 = vmatprep.subr.mxu0 0.0
      %1627 = vmatpush2.msra.mxu0 0.0
      %1628 = vmatprep.subr.mxu0 0.0
      %1629 = vmatpush2.msra.mxu0 0.0
      %1630 = vmatprep.subr.mxu0 0.0
      %1631 = vmatpush2.msra.mxu0 0.0
      %1632 = vmatprep.subr.mxu0 0.0
      %1633 = vmatpush2.msra.mxu0 0.0
      %1634 = vmatprep.mubr.f32.mxu0 0.0
      %1635 = vmatmul.mubr.f32.gmra.mxu0 %v445
      %v1636 = vpop.f32.mrf.mxu0
      %v1637 = vadd.f32 0.0, %v1636
      %v1638 = vpop.f32.mrf.mxu0
      %1639 = vdwg.mxu0
      %v1640 = vmax.f32 %v1637, 0.0
      %v1642 = vsel %vm555, %v1640, 0
      %1644 = vmatprep.subr.mxu0 0.0
      %1645 = vmatpush1.msra.mxu0 0.0
      %1646 = vmatprep.subr.mxu0 0.0
      %1647 = vmatpush1.msra.mxu0 0.0
      %1648 = vmatprep.subr.mxu0 0.0
      %1649 = vmatpush1.msra.mxu0 0.0
      %1650 = vmatprep.subr.mxu0 0.0
      %1651 = vmatpush1.msra.mxu0 0.0
      %1652 = vmatprep.subr.mxu0 0.0
      %1653 = vmatpush1.msra.mxu0 0.0
      %1654 = vmatprep.subr.mxu0 0.0
      %1655 = vmatpush1.msra.mxu0 0.0
      %1656 = vmatprep.subr.mxu0 0.0
      %1657 = vmatpush1.msra.mxu0 0.0
      %1658 = vmatprep.subr.mxu0 0.0
      %1659 = vmatpush1.msra.mxu0 0.0
      %1660 = vmatprep.subr.mxu0 0.0
      %1661 = vmatpush1.msra.mxu0 0.0
      %1662 = vmatprep.subr.mxu0 0.0
      %1663 = vmatpush1.msra.mxu0 0.0
      %1664 = vmatprep.subr.mxu0 0.0
      %1665 = vmatpush1.msra.mxu0 0.0
      %1666 = vmatprep.subr.mxu0 0.0
      %1667 = vmatpush1.msra.mxu0 0.0
      %1668 = vmatprep.subr.mxu0 0.0
      %1669 = vmatpush1.msra.mxu0 0.0
      %1670 = vmatprep.subr.mxu0 0.0
      %1671 = vmatpush1.msra.mxu0 0.0
      %1672 = vmatprep.subr.mxu0 0.0
      %1673 = vmatpush1.msra.mxu0 0.0
      %1674 = vmatprep.subr.mxu0 0.0
      %1675 = vmatpush1.msra.mxu0 %v1642
      %1676 = vmatprep.subr.mxu0 0.0
      %1677 = vmatpush2.msra.mxu0 0.0
      %1678 = vmatprep.subr.mxu0 0.0
      %1679 = vmatpush2.msra.mxu0 0.0
      %1680 = vmatprep.subr.mxu0 0.0
      %1681 = vmatpush2.msra.mxu0 0.0
      %1682 = vmatprep.subr.mxu0 0.0
      %1683 = vmatpush2.msra.mxu0 0.0
      %1684 = vmatprep.subr.mxu0 0.0
      %1685 = vmatpush2.msra.mxu0 0.0
      %1686 = vmatprep.subr.mxu0 0.0
      %1687 = vmatpush2.msra.mxu0 0.0
      %1688 = vmatprep.subr.mxu0 0.0
      %1689 = vmatpush2.msra.mxu0 0.0
      %1690 = vmatprep.subr.mxu0 0.0
      %1691 = vmatpush2.msra.mxu0 0.0
      %1692 = vmatprep.subr.mxu0 0.0
      %1693 = vmatpush2.msra.mxu0 0.0
      %1694 = vmatprep.subr.mxu0 0.0
      %1695 = vmatpush2.msra.mxu0 0.0
      %1696 = vmatprep.subr.mxu0 0.0
      %1697 = vmatpush2.msra.mxu0 0.0
      %1698 = vmatprep.subr.mxu0 0.0
      %1699 = vmatpush2.msra.mxu0 0.0
      %1700 = vmatprep.subr.mxu0 0.0
      %1701 = vmatpush2.msra.mxu0 0.0
      %1702 = vmatprep.subr.mxu0 0.0
      %1703 = vmatpush2.msra.mxu0 0.0
      %1704 = vmatprep.subr.mxu0 0.0
      %1705 = vmatpush2.msra.mxu0 0.0
      %1706 = vmatprep.subr.mxu0 0.0
      %1707 = vmatpush2.msra.mxu0 0.0
      %1708 = vmatprep.mubr.f32.mxu0 0.0
      %1709 = vmatmul.mubr.f32.gmra.mxu0 %v520
      %v1710 = vpop.f32.mrf.mxu0
      %v1711 = vadd.f32 0.0, %v1710
      %v1712 = vpop.f32.mrf.mxu0
      %1713 = vmatprep.mubr.f32.mxu0 0.0
      %1714 = vmatmul.mubr.f32.gmra.mxu0 %v523
      %v1715 = vpop.f32.mrf.mxu0
      %v1716 = vadd.f32 0.0, %v1715
      %v1717 = vpop.f32.mrf.mxu0
      %1718 = vmatprep.mubr.f32.mxu0 0.0
      %1719 = vmatmul.mubr.f32.gmra.mxu0 %v526
      %v1720 = vpop.f32.mrf.mxu0
      %v1721 = vadd.f32 0.0, %v1720
      %v1722 = vpop.f32.mrf.mxu0
      %1723 = vmatprep.mubr.f32.mxu0 0.0
      %1724 = vmatmul.mubr.f32.gmra.mxu0 %v529
      %v1725 = vpop.f32.mrf.mxu0
      %v1726 = vadd.f32 0.0, %v1725
      %v1727 = vpop.f32.mrf.mxu0
      %1728 = vmatprep.mubr.f32.mxu0 0.0
      %1729 = vmatmul.mubr.f32.gmra.mxu0 %v532
      %v1730 = vpop.f32.mrf.mxu0
      %v1731 = vadd.f32 0.0, %v1730
      %v1732 = vpop.f32.mrf.mxu0
      %1733 = vmatprep.mubr.f32.mxu0 0.0
      %1734 = vmatmul.mubr.f32.gmra.mxu0 %v535
      %v1735 = vpop.f32.mrf.mxu0
      %v1736 = vadd.f32 0.0, %v1735
      %v1737 = vpop.f32.mrf.mxu0
      %1738 = vmatprep.mubr.f32.mxu0 0.0
      %1739 = vmatmul.mubr.f32.gmra.mxu0 %v538
      %v1740 = vpop.f32.mrf.mxu0
      %v1741 = vadd.f32 0.0, %v1740
      %v1742 = vpop.f32.mrf.mxu0
      %1743 = vmatprep.mubr.f32.mxu0 0.0
      %1744 = vmatmul.mubr.f32.gmra.mxu0 %v541
      %v1745 = vpop.f32.mrf.mxu0
      %v1746 = vadd.f32 0.0, %v1745
      %v1747 = vpop.f32.mrf.mxu0
      %1748 = vmatprep.mubr.f32.mxu0 0.0
      %1749 = vmatmul.mubr.f32.gmra.mxu0 %v544
      %v1750 = vpop.f32.mrf.mxu0
      %v1751 = vadd.f32 0.0, %v1750
      %v1752 = vpop.f32.mrf.mxu0
      %1753 = vmatprep.mubr.f32.mxu0 0.0
      %1754 = vmatmul.mubr.f32.gmra.mxu0 %v547
      %v1755 = vpop.f32.mrf.mxu0
      %v1756 = vadd.f32 0.0, %v1755
      %v1757 = vpop.f32.mrf.mxu0
      %1758 = vmatprep.mubr.f32.mxu0 0.0
      %1759 = vmatmul.mubr.f32.gmra.mxu0 %v550
      %v1760 = vpop.f32.mrf.mxu0
      %v1761 = vadd.f32 0.0, %v1760
      %v1762 = vpop.f32.mrf.mxu0
      %1763 = vmatprep.mubr.f32.mxu0 0.0
      %1764 = vmatmul.mubr.f32.gmra.mxu0 %v553
      %v1765 = vpop.f32.mrf.mxu0
      %v1766 = vadd.f32 0.0, %v1765
      %v1767 = vpop.f32.mrf.mxu0
      %1768 = vdwg.mxu0
      %v1769 = vxor.u32 %v1711, 2147483648
      %v1770 = vxor.u32 %v1716, 2147483648
      %v1771 = vxor.u32 %v1721, 2147483648
      %v1772 = vxor.u32 %v1726, 2147483648
      %v1773 = vxor.u32 %v1731, 2147483648
      %v1774 = vxor.u32 %v1736, 2147483648
      %v1775 = vxor.u32 %v1741, 2147483648
      %v1776 = vxor.u32 %v1746, 2147483648
      %v1777 = vxor.u32 %v1751, 2147483648
      %v1778 = vxor.u32 %v1756, 2147483648
      %v1779 = vxor.u32 %v1761, 2147483648
      %v1780 = vxor.u32 %v1766, 2147483648
      %v1781 = vmul.f32 %v1769, 1.442695
      %v1782 = vpow.pop %v1781
      %v1783 = vmul.f32 %v1770, 1.442695
      %v1784 = vpow.pop %v1783
      %v1785 = vmul.f32 %v1771, 1.442695
      %v1786 = vpow.pop %v1785
      %v1787 = vmul.f32 %v1772, 1.442695
      %v1788 = vpow.pop %v1787
      %v1789 = vmul.f32 %v1773, 1.442695
      %v1790 = vpow.pop %v1789
      %v1791 = vmul.f32 %v1774, 1.442695
      %v1792 = vpow.pop %v1791
      %v1793 = vmul.f32 %v1775, 1.442695
      %v1794 = vpow.pop %v1793
      %v1795 = vmul.f32 %v1776, 1.442695
      %v1796 = vpow.pop %v1795
      %v1797 = vmul.f32 %v1777, 1.442695
      %v1798 = vpow.pop %v1797
      %v1799 = vmul.f32 %v1778, 1.442695
      %v1800 = vpow.pop %v1799
      %v1801 = vmul.f32 %v1779, 1.442695
      %v1802 = vpow.pop %v1801
      %v1803 = vmul.f32 %v1780, 1.442695
      %v1804 = vpow.pop %v1803
      %v1805 = vadd.f32 %v1782, 1.0
      %v1806 = vadd.f32 %v1784, 1.0
      %v1807 = vadd.f32 %v1786, 1.0
      %v1808 = vadd.f32 %v1788, 1.0
      %v1809 = vadd.f32 %v1790, 1.0
      %v1810 = vadd.f32 %v1792, 1.0
      %v1811 = vadd.f32 %v1794, 1.0
      %v1812 = vadd.f32 %v1796, 1.0
      %v1813 = vadd.f32 %v1798, 1.0
      %v1814 = vadd.f32 %v1800, 1.0
      %v1815 = vadd.f32 %v1802, 1.0
      %v1816 = vadd.f32 %v1804, 1.0
      %v1817 = vrcp.pop %v1805
      %v1818 = vmul.f32 1.0, %v1817
      %v1819 = vrcp.pop %v1806
      %v1820 = vmul.f32 1.0, %v1819
      %v1821 = vrcp.pop %v1807
      %v1822 = vmul.f32 1.0, %v1821
      %v1823 = vrcp.pop %v1808
      %v1824 = vmul.f32 1.0, %v1823
      %v1825 = vrcp.pop %v1809
      %v1826 = vmul.f32 1.0, %v1825
      %v1827 = vrcp.pop %v1810
      %v1828 = vmul.f32 1.0, %v1827
      %v1829 = vrcp.pop %v1811
      %v1830 = vmul.f32 1.0, %v1829
      %v1831 = vrcp.pop %v1812
      %v1832 = vmul.f32 1.0, %v1831
      %v1833 = vrcp.pop %v1813
      %v1834 = vmul.f32 1.0, %v1833
      %v1835 = vrcp.pop %v1814
      %v1836 = vmul.f32 1.0, %v1835
      %v1837 = vrcp.pop %v1815
      %v1838 = vmul.f32 1.0, %v1837
      %v1839 = vrcp.pop %v1816
      %v1840 = vmul.f32 1.0, %v1839
      %s1841 = scalar_lea.vmem %s247, 192
      %1842 = vst.msk [vmem:[%s1841] sm:$0xff] %vm756, %v1818
      %1843 = vst.msk [vmem:[%s1841 + $0x8] sm:$0xff] %vm756, %v1820
      %1844 = vst.msk [vmem:[%s1841 + $0x10] sm:$0xff] %vm756, %v1822
      %1845 = vst.msk [vmem:[%s1841 + $0x18] sm:$0xff] %vm756, %v1824
      %1846 = vst.msk [vmem:[%s1841 + $0x20] sm:$0xff] %vm756, %v1826
      %1847 = vst.msk [vmem:[%s1841 + $0x28] sm:$0xff] %vm756, %v1828
      %1848 = vst.msk [vmem:[%s1841 + $0x30] sm:$0xff] %vm756, %v1830
      %1849 = vst.msk [vmem:[%s1841 + $0x38] sm:$0xff] %vm756, %v1832
      %1850 = vst.msk [vmem:[%s1841 + $0x40] sm:$0xff] %vm756, %v1834
      %1851 = vst.msk [vmem:[%s1841 + $0x48] sm:$0xff] %vm756, %v1836
      %1852 = vst.msk [vmem:[%s1841 + $0x50] sm:$0xff] %vm756, %v1838
      %1853 = vst.msk [vmem:[%s1841 + $0x58] sm:$0xff] %vm756, %v1840
      %1855 = vset.pattern.permute.xlu0 0
      %1856 = vperm.xlu0 %1855, %v1818
      %v1857 = vpop.permute.xlu0 %1856
      %1860 = vset.pattern.permute.xlu0 0
      %1861 = vperm.xlu0 %1860, %v1820
      %v1862 = vpop.permute.xlu0 %1861
      %1865 = vset.pattern.permute.xlu0 0
      %1866 = vperm.xlu0 %1865, %v1822
      %v1867 = vpop.permute.xlu0 %1866
      %1870 = vset.pattern.permute.xlu0 0
      %1871 = vperm.xlu0 %1870, %v1824
      %v1872 = vpop.permute.xlu0 %1871
      %1875 = vset.pattern.permute.xlu0 0
      %1876 = vperm.xlu0 %1875, %v1826
      %v1877 = vpop.permute.xlu0 %1876
      %1880 = vset.pattern.permute.xlu0 0
      %1881 = vperm.xlu0 %1880, %v1828
      %v1882 = vpop.permute.xlu0 %1881
      %1885 = vset.pattern.permute.xlu0 0
      %1886 = vperm.xlu0 %1885, %v1830
      %v1887 = vpop.permute.xlu0 %1886
      %1890 = vset.pattern.permute.xlu0 0
      %1891 = vperm.xlu0 %1890, %v1832
      %v1892 = vpop.permute.xlu0 %1891
      %1895 = vset.pattern.permute.xlu0 0
      %1896 = vperm.xlu0 %1895, %v1834
      %v1897 = vpop.permute.xlu0 %1896
      %1900 = vset.pattern.permute.xlu0 0
      %1901 = vperm.xlu0 %1900, %v1836
      %v1902 = vpop.permute.xlu0 %1901
      %1905 = vset.pattern.permute.xlu0 0
      %1906 = vperm.xlu0 %1905, %v1838
      %v1907 = vpop.permute.xlu0 %1906
      %1910 = vset.pattern.permute.xlu0 0
      %1911 = vperm.xlu0 %1910, %v1840
      %v1912 = vpop.permute.xlu0 %1911
      %v1914 = vmul.f32 %v1421, %v1857
      %v1915 = vmul.f32 %v1422, %v1857
      %v1916 = vmul.f32 %v1423, %v1862
      %v1917 = vmul.f32 %v1424, %v1862
      %v1918 = vmul.f32 %v1425, %v1867
      %v1919 = vmul.f32 %v1426, %v1867
      %v1920 = vmul.f32 %v1427, %v1872
      %v1921 = vmul.f32 %v1428, %v1872
      %v1922 = vmul.f32 %v1429, %v1877
      %v1923 = vmul.f32 %v1430, %v1877
      %v1924 = vmul.f32 %v1431, %v1882
      %v1925 = vmul.f32 %v1432, %v1882
      %v1926 = vmul.f32 %v1433, %v1887
      %v1927 = vmul.f32 %v1434, %v1887
      %v1928 = vmul.f32 %v1435, %v1892
      %v1929 = vmul.f32 %v1436, %v1892
      %v1930 = vmul.f32 %v1437, %v1897
      %v1931 = vmul.f32 %v1438, %v1897
      %v1932 = vmul.f32 %v1439, %v1902
      %v1933 = vmul.f32 %v1440, %v1902
      %v1934 = vmul.f32 %v1441, %v1907
      %v1935 = vmul.f32 %v1442, %v1907
      %v1936 = vmul.f32 %v1443, %v1912
      %v1937 = vmul.f32 %v1444, %v1912
      %s1938 = scalar_lea.vmem %s240, 384
      %1939 = vst [vmem:[%s1938] sm:$0xff] %v1914
      %1940 = vst [vmem:[%s1938 + $0x8] sm:$0xff] %v1915
      %1941 = vst [vmem:[%s1938 + $0x10] sm:$0xff] %v1916
      %1942 = vst [vmem:[%s1938 + $0x18] sm:$0xff] %v1917
      %1943 = vst [vmem:[%s1938 + $0x20] sm:$0xff] %v1918
      %1944 = vst [vmem:[%s1938 + $0x28] sm:$0xff] %v1919
      %1945 = vst [vmem:[%s1938 + $0x30] sm:$0xff] %v1920
      %1946 = vst [vmem:[%s1938 + $0x38] sm:$0xff] %v1921
      %1947 = vst [vmem:[%s1938 + $0x40] sm:$0xff] %v1922
      %1948 = vst [vmem:[%s1938 + $0x48] sm:$0xff] %v1923
      %1949 = vst [vmem:[%s1938 + $0x50] sm:$0xff] %v1924
      %1950 = vst [vmem:[%s1938 + $0x58] sm:$0xff] %v1925
      %1951 = vst [vmem:[%s1938 + $0x60] sm:$0xff] %v1926
      %1952 = vst [vmem:[%s1938 + $0x68] sm:$0xff] %v1927
      %1953 = vst [vmem:[%s1938 + $0x70] sm:$0xff] %v1928
      %1954 = vst [vmem:[%s1938 + $0x78] sm:$0xff] %v1929
      %1955 = vst [vmem:[%s1938 + $0x80] sm:$0xff] %v1930
      %1956 = vst [vmem:[%s1938 + $0x88] sm:$0xff] %v1931
      %1957 = vst [vmem:[%s1938 + $0x90] sm:$0xff] %v1932
      %1958 = vst [vmem:[%s1938 + $0x98] sm:$0xff] %v1933
      %1959 = vst [vmem:[%s1938 + $0xa0] sm:$0xff] %v1934
      %1960 = vst [vmem:[%s1938 + $0xa8] sm:$0xff] %v1935
      %1961 = vst [vmem:[%s1938 + $0xb0] sm:$0xff] %v1936
      %1962 = vst [vmem:[%s1938 + $0xb8] sm:$0xff] %v1937
      %s1963 = scalar_lea.vmem %s233, 576
      %v1964 = vld [vmem:[%s1963] sm:$0xff]
      %v1965 = vld [vmem:[%s1963 + $0x8] sm:$0xff]
      %v1966 = vld [vmem:[%s1963 + $0x10] sm:$0xff]
      %v1967 = vld [vmem:[%s1963 + $0x18] sm:$0xff]
      %v1968 = vld [vmem:[%s1963 + $0x20] sm:$0xff]
      %v1969 = vld [vmem:[%s1963 + $0x28] sm:$0xff]
      %v1970 = vld [vmem:[%s1963 + $0x30] sm:$0xff]
      %v1971 = vld [vmem:[%s1963 + $0x38] sm:$0xff]
      %v1972 = vld [vmem:[%s1963 + $0x40] sm:$0xff]
      %v1973 = vld [vmem:[%s1963 + $0x48] sm:$0xff]
      %v1974 = vld [vmem:[%s1963 + $0x50] sm:$0xff]
      %v1975 = vld [vmem:[%s1963 + $0x58] sm:$0xff]
      %v1976 = vld [vmem:[%s1963 + $0x60] sm:$0xff]
      %v1977 = vld [vmem:[%s1963 + $0x68] sm:$0xff]
      %v1978 = vld [vmem:[%s1963 + $0x70] sm:$0xff]
      %v1979 = vld [vmem:[%s1963 + $0x78] sm:$0xff]
      %v1980 = vld [vmem:[%s1963 + $0x80] sm:$0xff]
      %v1981 = vld [vmem:[%s1963 + $0x88] sm:$0xff]
      %v1982 = vld [vmem:[%s1963 + $0x90] sm:$0xff]
      %v1983 = vld [vmem:[%s1963 + $0x98] sm:$0xff]
      %v1984 = vld [vmem:[%s1963 + $0xa0] sm:$0xff]
      %v1985 = vld [vmem:[%s1963 + $0xa8] sm:$0xff]
      %v1986 = vld [vmem:[%s1963 + $0xb0] sm:$0xff]
      %v1987 = vld [vmem:[%s1963 + $0xb8] sm:$0xff]
      %1988 = vmatprep.subr.mxu0 0.0
      %1989 = vmatpush1.msra.mxu0 %v277
      %1990 = vmatprep.subr.mxu0 0.0
      %1991 = vmatpush1.msra.mxu0 %v276
      %1992 = vmatprep.subr.mxu0 0.0
      %1993 = vmatpush1.msra.mxu0 %v275
      %1994 = vmatprep.subr.mxu0 0.0
      %1995 = vmatpush1.msra.mxu0 %v274
      %1996 = vmatprep.subr.mxu0 0.0
      %1997 = vmatpush1.msra.mxu0 %v273
      %1998 = vmatprep.subr.mxu0 0.0
      %1999 = vmatpush1.msra.mxu0 %v272
      %2000 = vmatprep.subr.mxu0 0.0
      %2001 = vmatpush1.msra.mxu0 %v271
      %2002 = vmatprep.subr.mxu0 0.0
      %2003 = vmatpush1.msra.mxu0 %v270
      %2004 = vmatprep.subr.mxu0 0.0
      %2005 = vmatpush1.msra.mxu0 %v269
      %2006 = vmatprep.subr.mxu0 0.0
      %2007 = vmatpush1.msra.mxu0 %v268
      %2008 = vmatprep.subr.mxu0 0.0
      %2009 = vmatpush1.msra.mxu0 %v267
      %2010 = vmatprep.subr.mxu0 0.0
      %2011 = vmatpush1.msra.mxu0 %v266
      %2012 = vmatprep.subr.mxu0 0.0
      %2013 = vmatpush1.msra.mxu0 %v265
      %2014 = vmatprep.subr.mxu0 0.0
      %2015 = vmatpush1.msra.mxu0 %v264
      %2016 = vmatprep.subr.mxu0 0.0
      %2017 = vmatpush1.msra.mxu0 %v263
      %2018 = vmatprep.subr.mxu0 0.0
      %2019 = vmatpush1.msra.mxu0 %v262
      %2020 = vmatprep.subr.mxu0 0.0
      %2021 = vmatpush2.msra.mxu0 %v293
      %2022 = vmatprep.subr.mxu0 0.0
      %2023 = vmatpush2.msra.mxu0 %v292
      %2024 = vmatprep.subr.mxu0 0.0
      %2025 = vmatpush2.msra.mxu0 %v291
      %2026 = vmatprep.subr.mxu0 0.0
      %2027 = vmatpush2.msra.mxu0 %v290
      %2028 = vmatprep.subr.mxu0 0.0
      %2029 = vmatpush2.msra.mxu0 %v289
      %2030 = vmatprep.subr.mxu0 0.0
      %2031 = vmatpush2.msra.mxu0 %v288
      %2032 = vmatprep.subr.mxu0 0.0
      %2033 = vmatpush2.msra.mxu0 %v287
      %2034 = vmatprep.subr.mxu0 0.0
      %2035 = vmatpush2.msra.mxu0 %v286
      %2036 = vmatprep.subr.mxu0 0.0
      %2037 = vmatpush2.msra.mxu0 %v285
      %2038 = vmatprep.subr.mxu0 0.0
      %2039 = vmatpush2.msra.mxu0 %v284
      %2040 = vmatprep.subr.mxu0 0.0
      %2041 = vmatpush2.msra.mxu0 %v283
      %2042 = vmatprep.subr.mxu0 0.0
      %2043 = vmatpush2.msra.mxu0 %v282
      %2044 = vmatprep.subr.mxu0 0.0
      %2045 = vmatpush2.msra.mxu0 %v281
      %2046 = vmatprep.subr.mxu0 0.0
      %2047 = vmatpush2.msra.mxu0 %v280
      %2048 = vmatprep.subr.mxu0 0.0
      %2049 = vmatpush2.msra.mxu0 %v279
      %2050 = vmatprep.subr.mxu0 0.0
      %2051 = vmatpush2.msra.mxu0 %v278
      %2052 = vmatprep.mubr.f32.mxu0 %v1965
      %2053 = vmatmul.mubr.f32.gmra.mxu0 %v1964
      %v2054 = vpop.f32.mrf.mxu0
      %v2055 = vadd.f32 0.0, %v2054
      %v2056 = vpop.f32.mrf.mxu0
      %2057 = vmatprep.mubr.f32.mxu0 %v1967
      %2058 = vmatmul.mubr.f32.gmra.mxu0 %v1966
      %v2059 = vpop.f32.mrf.mxu0
      %v2060 = vadd.f32 0.0, %v2059
      %v2061 = vpop.f32.mrf.mxu0
      %2062 = vmatprep.mubr.f32.mxu0 %v1969
      %2063 = vmatmul.mubr.f32.gmra.mxu0 %v1968
      %v2064 = vpop.f32.mrf.mxu0
      %v2065 = vadd.f32 0.0, %v2064
      %v2066 = vpop.f32.mrf.mxu0
      %2067 = vmatprep.mubr.f32.mxu0 %v1971
      %2068 = vmatmul.mubr.f32.gmra.mxu0 %v1970
      %v2069 = vpop.f32.mrf.mxu0
      %v2070 = vadd.f32 0.0, %v2069
      %v2071 = vpop.f32.mrf.mxu0
      %2072 = vmatprep.mubr.f32.mxu0 %v1973
      %2073 = vmatmul.mubr.f32.gmra.mxu0 %v1972
      %v2074 = vpop.f32.mrf.mxu0
      %v2075 = vadd.f32 0.0, %v2074
      %v2076 = vpop.f32.mrf.mxu0
      %2077 = vmatprep.mubr.f32.mxu0 %v1975
      %2078 = vmatmul.mubr.f32.gmra.mxu0 %v1974
      %v2079 = vpop.f32.mrf.mxu0
      %v2080 = vadd.f32 0.0, %v2079
      %v2081 = vpop.f32.mrf.mxu0
      %2082 = vmatprep.mubr.f32.mxu0 %v1977
      %2083 = vmatmul.mubr.f32.gmra.mxu0 %v1976
      %v2084 = vpop.f32.mrf.mxu0
      %v2085 = vadd.f32 0.0, %v2084
      %v2086 = vpop.f32.mrf.mxu0
      %2087 = vmatprep.mubr.f32.mxu0 %v1979
      %2088 = vmatmul.mubr.f32.gmra.mxu0 %v1978
      %v2089 = vpop.f32.mrf.mxu0
      %v2090 = vadd.f32 0.0, %v2089
      %v2091 = vpop.f32.mrf.mxu0
      %2092 = vmatprep.mubr.f32.mxu0 %v1981
      %2093 = vmatmul.mubr.f32.gmra.mxu0 %v1980
      %v2094 = vpop.f32.mrf.mxu0
      %v2095 = vadd.f32 0.0, %v2094
      %v2096 = vpop.f32.mrf.mxu0
      %2097 = vmatprep.mubr.f32.mxu0 %v1983
      %2098 = vmatmul.mubr.f32.gmra.mxu0 %v1982
      %v2099 = vpop.f32.mrf.mxu0
      %v2100 = vadd.f32 0.0, %v2099
      %v2101 = vpop.f32.mrf.mxu0
      %2102 = vmatprep.mubr.f32.mxu0 %v1985
      %2103 = vmatmul.mubr.f32.gmra.mxu0 %v1984
      %v2104 = vpop.f32.mrf.mxu0
      %v2105 = vadd.f32 0.0, %v2104
      %v2106 = vpop.f32.mrf.mxu0
      %2107 = vmatprep.mubr.f32.mxu0 %v1987
      %2108 = vmatmul.mubr.f32.gmra.mxu0 %v1986
      %v2109 = vpop.f32.mrf.mxu0
      %v2110 = vadd.f32 0.0, %v2109
      %v2111 = vpop.f32.mrf.mxu0
      %2112 = vdwg.mxu0
      %2113 = vmatprep.subr.mxu0 0.0
      %2114 = vmatpush1.msra.mxu0 0.0
      %2115 = vmatprep.subr.mxu0 0.0
      %2116 = vmatpush1.msra.mxu0 0.0
      %2117 = vmatprep.subr.mxu0 0.0
      %2118 = vmatpush1.msra.mxu0 0.0
      %2119 = vmatprep.subr.mxu0 0.0
      %2120 = vmatpush1.msra.mxu0 0.0
      %2121 = vmatprep.subr.mxu0 0.0
      %2122 = vmatpush1.msra.mxu0 %v2110
      %2123 = vmatprep.subr.mxu0 0.0
      %2124 = vmatpush1.msra.mxu0 %v2105
      %2125 = vmatprep.subr.mxu0 0.0
      %2126 = vmatpush1.msra.mxu0 %v2100
      %2127 = vmatprep.subr.mxu0 0.0
      %2128 = vmatpush1.msra.mxu0 %v2095
      %2129 = vmatprep.subr.mxu0 0.0
      %2130 = vmatpush1.msra.mxu0 %v2090
      %2131 = vmatprep.subr.mxu0 0.0
      %2132 = vmatpush1.msra.mxu0 %v2085
      %2133 = vmatprep.subr.mxu0 0.0
      %2134 = vmatpush1.msra.mxu0 %v2080
      %2135 = vmatprep.subr.mxu0 0.0
      %2136 = vmatpush1.msra.mxu0 %v2075
      %2137 = vmatprep.subr.mxu0 0.0
      %2138 = vmatpush1.msra.mxu0 %v2070
      %2139 = vmatprep.subr.mxu0 0.0
      %2140 = vmatpush1.msra.mxu0 %v2065
      %2141 = vmatprep.subr.mxu0 0.0
      %2142 = vmatpush1.msra.mxu0 %v2060
      %2143 = vmatprep.subr.mxu0 0.0
      %2144 = vmatpush1.msra.mxu0 %v2055
      %2145 = vmatprep.subr.mxu0 0.0
      %2146 = vmatpush2.msra.mxu0 0.0
      %2147 = vmatprep.subr.mxu0 0.0
      %2148 = vmatpush2.msra.mxu0 0.0
      %2149 = vmatprep.subr.mxu0 0.0
      %2150 = vmatpush2.msra.mxu0 0.0
      %2151 = vmatprep.subr.mxu0 0.0
      %2152 = vmatpush2.msra.mxu0 0.0
      %2153 = vmatprep.subr.mxu0 0.0
      %2154 = vmatpush2.msra.mxu0 0.0
      %2155 = vmatprep.subr.mxu0 0.0
      %2156 = vmatpush2.msra.mxu0 0.0
      %2157 = vmatprep.subr.mxu0 0.0
      %2158 = vmatpush2.msra.mxu0 0.0
      %2159 = vmatprep.subr.mxu0 0.0
      %2160 = vmatpush2.msra.mxu0 0.0
      %2161 = vmatprep.subr.mxu0 0.0
      %2162 = vmatpush2.msra.mxu0 0.0
      %2163 = vmatprep.subr.mxu0 0.0
      %2164 = vmatpush2.msra.mxu0 0.0
      %2165 = vmatprep.subr.mxu0 0.0
      %2166 = vmatpush2.msra.mxu0 0.0
      %2167 = vmatprep.subr.mxu0 0.0
      %2168 = vmatpush2.msra.mxu0 0.0
      %2169 = vmatprep.subr.mxu0 0.0
      %2170 = vmatpush2.msra.mxu0 0.0
      %2171 = vmatprep.subr.mxu0 0.0
      %2172 = vmatpush2.msra.mxu0 0.0
      %2173 = vmatprep.subr.mxu0 0.0
      %2174 = vmatpush2.msra.mxu0 0.0
      %2175 = vmatprep.subr.mxu0 0.0
      %2176 = vmatpush2.msra.mxu0 0.0
      %2177 = vmatprep.mubr.f32.mxu0 0.0
      %2178 = vmatmul.mubr.f32.gmra.mxu0 %v445
      %v2179 = vpop.f32.mrf.mxu0
      %v2180 = vadd.f32 0.0, %v2179
      %v2181 = vpop.f32.mrf.mxu0
      %2182 = vdwg.mxu0
      %v2183 = vmax.f32 %v2180, 0.0
      %v2185 = vsel %vm555, %v2183, 0
      %2187 = vmatprep.subr.mxu0 0.0
      %2188 = vmatpush1.msra.mxu0 0.0
      %2189 = vmatprep.subr.mxu0 0.0
      %2190 = vmatpush1.msra.mxu0 0.0
      %2191 = vmatprep.subr.mxu0 0.0
      %2192 = vmatpush1.msra.mxu0 0.0
      %2193 = vmatprep.subr.mxu0 0.0
      %2194 = vmatpush1.msra.mxu0 0.0
      %2195 = vmatprep.subr.mxu0 0.0
      %2196 = vmatpush1.msra.mxu0 0.0
      %2197 = vmatprep.subr.mxu0 0.0
      %2198 = vmatpush1.msra.mxu0 0.0
      %2199 = vmatprep.subr.mxu0 0.0
      %2200 = vmatpush1.msra.mxu0 0.0
      %2201 = vmatprep.subr.mxu0 0.0
      %2202 = vmatpush1.msra.mxu0 0.0
      %2203 = vmatprep.subr.mxu0 0.0
      %2204 = vmatpush1.msra.mxu0 0.0
      %2205 = vmatprep.subr.mxu0 0.0
      %2206 = vmatpush1.msra.mxu0 0.0
      %2207 = vmatprep.subr.mxu0 0.0
      %2208 = vmatpush1.msra.mxu0 0.0
      %2209 = vmatprep.subr.mxu0 0.0
      %2210 = vmatpush1.msra.mxu0 0.0
      %2211 = vmatprep.subr.mxu0 0.0
      %2212 = vmatpush1.msra.mxu0 0.0
      %2213 = vmatprep.subr.mxu0 0.0
      %2214 = vmatpush1.msra.mxu0 0.0
      %2215 = vmatprep.subr.mxu0 0.0
      %2216 = vmatpush1.msra.mxu0 0.0
      %2217 = vmatprep.subr.mxu0 0.0
      %2218 = vmatpush1.msra.mxu0 %v2185
      %2219 = vmatprep.subr.mxu0 0.0
      %2220 = vmatpush2.msra.mxu0 0.0
      %2221 = vmatprep.subr.mxu0 0.0
      %2222 = vmatpush2.msra.mxu0 0.0
      %2223 = vmatprep.subr.mxu0 0.0
      %2224 = vmatpush2.msra.mxu0 0.0
      %2225 = vmatprep.subr.mxu0 0.0
      %2226 = vmatpush2.msra.mxu0 0.0
      %2227 = vmatprep.subr.mxu0 0.0
      %2228 = vmatpush2.msra.mxu0 0.0
      %2229 = vmatprep.subr.mxu0 0.0
      %2230 = vmatpush2.msra.mxu0 0.0
      %2231 = vmatprep.subr.mxu0 0.0
      %2232 = vmatpush2.msra.mxu0 0.0
      %2233 = vmatprep.subr.mxu0 0.0
      %2234 = vmatpush2.msra.mxu0 0.0
      %2235 = vmatprep.subr.mxu0 0.0
      %2236 = vmatpush2.msra.mxu0 0.0
      %2237 = vmatprep.subr.mxu0 0.0
      %2238 = vmatpush2.msra.mxu0 0.0
      %2239 = vmatprep.subr.mxu0 0.0
      %2240 = vmatpush2.msra.mxu0 0.0
      %2241 = vmatprep.subr.mxu0 0.0
      %2242 = vmatpush2.msra.mxu0 0.0
      %2243 = vmatprep.subr.mxu0 0.0
      %2244 = vmatpush2.msra.mxu0 0.0
      %2245 = vmatprep.subr.mxu0 0.0
      %2246 = vmatpush2.msra.mxu0 0.0
      %2247 = vmatprep.subr.mxu0 0.0
      %2248 = vmatpush2.msra.mxu0 0.0
      %2249 = vmatprep.subr.mxu0 0.0
      %2250 = vmatpush2.msra.mxu0 0.0
      %2251 = vmatprep.mubr.f32.mxu0 0.0
      %2252 = vmatmul.mubr.f32.gmra.mxu0 %v520
      %v2253 = vpop.f32.mrf.mxu0
      %v2254 = vadd.f32 0.0, %v2253
      %v2255 = vpop.f32.mrf.mxu0
      %2256 = vmatprep.mubr.f32.mxu0 0.0
      %2257 = vmatmul.mubr.f32.gmra.mxu0 %v523
      %v2258 = vpop.f32.mrf.mxu0
      %v2259 = vadd.f32 0.0, %v2258
      %v2260 = vpop.f32.mrf.mxu0
      %2261 = vmatprep.mubr.f32.mxu0 0.0
      %2262 = vmatmul.mubr.f32.gmra.mxu0 %v526
      %v2263 = vpop.f32.mrf.mxu0
      %v2264 = vadd.f32 0.0, %v2263
      %v2265 = vpop.f32.mrf.mxu0
      %2266 = vmatprep.mubr.f32.mxu0 0.0
      %2267 = vmatmul.mubr.f32.gmra.mxu0 %v529
      %v2268 = vpop.f32.mrf.mxu0
      %v2269 = vadd.f32 0.0, %v2268
      %v2270 = vpop.f32.mrf.mxu0
      %2271 = vmatprep.mubr.f32.mxu0 0.0
      %2272 = vmatmul.mubr.f32.gmra.mxu0 %v532
      %v2273 = vpop.f32.mrf.mxu0
      %v2274 = vadd.f32 0.0, %v2273
      %v2275 = vpop.f32.mrf.mxu0
      %2276 = vmatprep.mubr.f32.mxu0 0.0
      %2277 = vmatmul.mubr.f32.gmra.mxu0 %v535
      %v2278 = vpop.f32.mrf.mxu0
      %v2279 = vadd.f32 0.0, %v2278
      %v2280 = vpop.f32.mrf.mxu0
      %2281 = vmatprep.mubr.f32.mxu0 0.0
      %2282 = vmatmul.mubr.f32.gmra.mxu0 %v538
      %v2283 = vpop.f32.mrf.mxu0
      %v2284 = vadd.f32 0.0, %v2283
      %v2285 = vpop.f32.mrf.mxu0
      %2286 = vmatprep.mubr.f32.mxu0 0.0
      %2287 = vmatmul.mubr.f32.gmra.mxu0 %v541
      %v2288 = vpop.f32.mrf.mxu0
      %v2289 = vadd.f32 0.0, %v2288
      %v2290 = vpop.f32.mrf.mxu0
      %2291 = vmatprep.mubr.f32.mxu0 0.0
      %2292 = vmatmul.mubr.f32.gmra.mxu0 %v544
      %v2293 = vpop.f32.mrf.mxu0
      %v2294 = vadd.f32 0.0, %v2293
      %v2295 = vpop.f32.mrf.mxu0
      %2296 = vmatprep.mubr.f32.mxu0 0.0
      %2297 = vmatmul.mubr.f32.gmra.mxu0 %v547
      %v2298 = vpop.f32.mrf.mxu0
      %v2299 = vadd.f32 0.0, %v2298
      %v2300 = vpop.f32.mrf.mxu0
      %2301 = vmatprep.mubr.f32.mxu0 0.0
      %2302 = vmatmul.mubr.f32.gmra.mxu0 %v550
      %v2303 = vpop.f32.mrf.mxu0
      %v2304 = vadd.f32 0.0, %v2303
      %v2305 = vpop.f32.mrf.mxu0
      %2306 = vmatprep.mubr.f32.mxu0 0.0
      %2307 = vmatmul.mubr.f32.gmra.mxu0 %v553
      %v2308 = vpop.f32.mrf.mxu0
      %v2309 = vadd.f32 0.0, %v2308
      %v2310 = vpop.f32.mrf.mxu0
      %2311 = vdwg.mxu0
      %v2312 = vxor.u32 %v2254, 2147483648
      %v2313 = vxor.u32 %v2259, 2147483648
      %v2314 = vxor.u32 %v2264, 2147483648
      %v2315 = vxor.u32 %v2269, 2147483648
      %v2316 = vxor.u32 %v2274, 2147483648
      %v2317 = vxor.u32 %v2279, 2147483648
      %v2318 = vxor.u32 %v2284, 2147483648
      %v2319 = vxor.u32 %v2289, 2147483648
      %v2320 = vxor.u32 %v2294, 2147483648
      %v2321 = vxor.u32 %v2299, 2147483648
      %v2322 = vxor.u32 %v2304, 2147483648
      %v2323 = vxor.u32 %v2309, 2147483648
      %v2324 = vmul.f32 %v2312, 1.442695
      %v2325 = vpow.pop %v2324
      %v2326 = vmul.f32 %v2313, 1.442695
      %v2327 = vpow.pop %v2326
      %v2328 = vmul.f32 %v2314, 1.442695
      %v2329 = vpow.pop %v2328
      %v2330 = vmul.f32 %v2315, 1.442695
      %v2331 = vpow.pop %v2330
      %v2332 = vmul.f32 %v2316, 1.442695
      %v2333 = vpow.pop %v2332
      %v2334 = vmul.f32 %v2317, 1.442695
      %v2335 = vpow.pop %v2334
      %v2336 = vmul.f32 %v2318, 1.442695
      %v2337 = vpow.pop %v2336
      %v2338 = vmul.f32 %v2319, 1.442695
      %v2339 = vpow.pop %v2338
      %v2340 = vmul.f32 %v2320, 1.442695
      %v2341 = vpow.pop %v2340
      %v2342 = vmul.f32 %v2321, 1.442695
      %v2343 = vpow.pop %v2342
      %v2344 = vmul.f32 %v2322, 1.442695
      %v2345 = vpow.pop %v2344
      %v2346 = vmul.f32 %v2323, 1.442695
      %v2347 = vpow.pop %v2346
      %v2348 = vadd.f32 %v2325, 1.0
      %v2349 = vadd.f32 %v2327, 1.0
      %v2350 = vadd.f32 %v2329, 1.0
      %v2351 = vadd.f32 %v2331, 1.0
      %v2352 = vadd.f32 %v2333, 1.0
      %v2353 = vadd.f32 %v2335, 1.0
      %v2354 = vadd.f32 %v2337, 1.0
      %v2355 = vadd.f32 %v2339, 1.0
      %v2356 = vadd.f32 %v2341, 1.0
      %v2357 = vadd.f32 %v2343, 1.0
      %v2358 = vadd.f32 %v2345, 1.0
      %v2359 = vadd.f32 %v2347, 1.0
      %v2360 = vrcp.pop %v2348
      %v2361 = vmul.f32 1.0, %v2360
      %v2362 = vrcp.pop %v2349
      %v2363 = vmul.f32 1.0, %v2362
      %v2364 = vrcp.pop %v2350
      %v2365 = vmul.f32 1.0, %v2364
      %v2366 = vrcp.pop %v2351
      %v2367 = vmul.f32 1.0, %v2366
      %v2368 = vrcp.pop %v2352
      %v2369 = vmul.f32 1.0, %v2368
      %v2370 = vrcp.pop %v2353
      %v2371 = vmul.f32 1.0, %v2370
      %v2372 = vrcp.pop %v2354
      %v2373 = vmul.f32 1.0, %v2372
      %v2374 = vrcp.pop %v2355
      %v2375 = vmul.f32 1.0, %v2374
      %v2376 = vrcp.pop %v2356
      %v2377 = vmul.f32 1.0, %v2376
      %v2378 = vrcp.pop %v2357
      %v2379 = vmul.f32 1.0, %v2378
      %v2380 = vrcp.pop %v2358
      %v2381 = vmul.f32 1.0, %v2380
      %v2382 = vrcp.pop %v2359
      %v2383 = vmul.f32 1.0, %v2382
      %s2384 = scalar_lea.vmem %s247, 288
      %2385 = vst.msk [vmem:[%s2384] sm:$0xff] %vm756, %v2361
      %2386 = vst.msk [vmem:[%s2384 + $0x8] sm:$0xff] %vm756, %v2363
      %2387 = vst.msk [vmem:[%s2384 + $0x10] sm:$0xff] %vm756, %v2365
      %2388 = vst.msk [vmem:[%s2384 + $0x18] sm:$0xff] %vm756, %v2367
      %2389 = vst.msk [vmem:[%s2384 + $0x20] sm:$0xff] %vm756, %v2369
      %2390 = vst.msk [vmem:[%s2384 + $0x28] sm:$0xff] %vm756, %v2371
      %2391 = vst.msk [vmem:[%s2384 + $0x30] sm:$0xff] %vm756, %v2373
      %2392 = vst.msk [vmem:[%s2384 + $0x38] sm:$0xff] %vm756, %v2375
      %2393 = vst.msk [vmem:[%s2384 + $0x40] sm:$0xff] %vm756, %v2377
      %2394 = vst.msk [vmem:[%s2384 + $0x48] sm:$0xff] %vm756, %v2379
      %2395 = vst.msk [vmem:[%s2384 + $0x50] sm:$0xff] %vm756, %v2381
      %2396 = vst.msk [vmem:[%s2384 + $0x58] sm:$0xff] %vm756, %v2383
      %2398 = vset.pattern.permute.xlu0 0
      %2399 = vperm.xlu0 %2398, %v2361
      %v2400 = vpop.permute.xlu0 %2399
      %2403 = vset.pattern.permute.xlu0 0
      %2404 = vperm.xlu0 %2403, %v2363
      %v2405 = vpop.permute.xlu0 %2404
      %2408 = vset.pattern.permute.xlu0 0
      %2409 = vperm.xlu0 %2408, %v2365
      %v2410 = vpop.permute.xlu0 %2409
      %2413 = vset.pattern.permute.xlu0 0
      %2414 = vperm.xlu0 %2413, %v2367
      %v2415 = vpop.permute.xlu0 %2414
      %2418 = vset.pattern.permute.xlu0 0
      %2419 = vperm.xlu0 %2418, %v2369
      %v2420 = vpop.permute.xlu0 %2419
      %2423 = vset.pattern.permute.xlu0 0
      %2424 = vperm.xlu0 %2423, %v2371
      %v2425 = vpop.permute.xlu0 %2424
      %2428 = vset.pattern.permute.xlu0 0
      %2429 = vperm.xlu0 %2428, %v2373
      %v2430 = vpop.permute.xlu0 %2429
      %2433 = vset.pattern.permute.xlu0 0
      %2434 = vperm.xlu0 %2433, %v2375
      %v2435 = vpop.permute.xlu0 %2434
      %2438 = vset.pattern.permute.xlu0 0
      %2439 = vperm.xlu0 %2438, %v2377
      %v2440 = vpop.permute.xlu0 %2439
      %2443 = vset.pattern.permute.xlu0 0
      %2444 = vperm.xlu0 %2443, %v2379
      %v2445 = vpop.permute.xlu0 %2444
      %2448 = vset.pattern.permute.xlu0 0
      %2449 = vperm.xlu0 %2448, %v2381
      %v2450 = vpop.permute.xlu0 %2449
      %2453 = vset.pattern.permute.xlu0 0
      %2454 = vperm.xlu0 %2453, %v2383
      %v2455 = vpop.permute.xlu0 %2454
      %v2457 = vmul.f32 %v1964, %v2400
      %v2458 = vmul.f32 %v1965, %v2400
      %v2459 = vmul.f32 %v1966, %v2405
      %v2460 = vmul.f32 %v1967, %v2405
      %v2461 = vmul.f32 %v1968, %v2410
      %v2462 = vmul.f32 %v1969, %v2410
      %v2463 = vmul.f32 %v1970, %v2415
      %v2464 = vmul.f32 %v1971, %v2415
      %v2465 = vmul.f32 %v1972, %v2420
      %v2466 = vmul.f32 %v1973, %v2420
      %v2467 = vmul.f32 %v1974, %v2425
      %v2468 = vmul.f32 %v1975, %v2425
      %v2469 = vmul.f32 %v1976, %v2430
      %v2470 = vmul.f32 %v1977, %v2430
      %v2471 = vmul.f32 %v1978, %v2435
      %v2472 = vmul.f32 %v1979, %v2435
      %v2473 = vmul.f32 %v1980, %v2440
      %v2474 = vmul.f32 %v1981, %v2440
      %v2475 = vmul.f32 %v1982, %v2445
      %v2476 = vmul.f32 %v1983, %v2445
      %v2477 = vmul.f32 %v1984, %v2450
      %v2478 = vmul.f32 %v1985, %v2450
      %v2479 = vmul.f32 %v1986, %v2455
      %v2480 = vmul.f32 %v1987, %v2455
      %s2481 = scalar_lea.vmem %s240, 576
      %2482 = vst [vmem:[%s2481] sm:$0xff] %v2457
      %2483 = vst [vmem:[%s2481 + $0x8] sm:$0xff] %v2458
      %2484 = vst [vmem:[%s2481 + $0x10] sm:$0xff] %v2459
      %2485 = vst [vmem:[%s2481 + $0x18] sm:$0xff] %v2460
      %2486 = vst [vmem:[%s2481 + $0x20] sm:$0xff] %v2461
      %2487 = vst [vmem:[%s2481 + $0x28] sm:$0xff] %v2462
      %2488 = vst [vmem:[%s2481 + $0x30] sm:$0xff] %v2463
      %2489 = vst [vmem:[%s2481 + $0x38] sm:$0xff] %v2464
      %2490 = vst [vmem:[%s2481 + $0x40] sm:$0xff] %v2465
      %2491 = vst [vmem:[%s2481 + $0x48] sm:$0xff] %v2466
      %2492 = vst [vmem:[%s2481 + $0x50] sm:$0xff] %v2467
      %2493 = vst [vmem:[%s2481 + $0x58] sm:$0xff] %v2468
      %2494 = vst [vmem:[%s2481 + $0x60] sm:$0xff] %v2469
      %2495 = vst [vmem:[%s2481 + $0x68] sm:$0xff] %v2470
      %2496 = vst [vmem:[%s2481 + $0x70] sm:$0xff] %v2471
      %2497 = vst [vmem:[%s2481 + $0x78] sm:$0xff] %v2472
      %2498 = vst [vmem:[%s2481 + $0x80] sm:$0xff] %v2473
      %2499 = vst [vmem:[%s2481 + $0x88] sm:$0xff] %v2474
      %2500 = vst [vmem:[%s2481 + $0x90] sm:$0xff] %v2475
      %2501 = vst [vmem:[%s2481 + $0x98] sm:$0xff] %v2476
      %2502 = vst [vmem:[%s2481 + $0xa0] sm:$0xff] %v2477
      %2503 = vst [vmem:[%s2481 + $0xa8] sm:$0xff] %v2478
      %2504 = vst [vmem:[%s2481 + $0xb0] sm:$0xff] %v2479
      %2505 = vst [vmem:[%s2481 + $0xb8] sm:$0xff] %v2480
      %s2506 = smul.u32 4, %s17
      %p2507 = scmp.lt.s32.totalorder %s2506, 7
      %s2508 = scalar_select %p2507, %s2506, 7
      %s2509 = smul.addr %s2508, 24
      %s2510 = smul.addr %s2509, 8
      %s2511 = scalar_lea.vmem %s4, %s2510
      %s2512 = smul.u32 4, %s17
      %p2513 = scmp.lt.s32.totalorder %s2512, 7
      %s2514 = scalar_select %p2513, %s2512, 7
      %s2515 = smul.addr %s2514, 12
      %s2516 = smul.addr %s2515, 8
      %s2517 = scalar_lea.vmem %s5, %s2516
      // Predicated region
      $region37: #{attention_module.1} parent=35 // pred_check
        %p2518 = pneg %p124
      $region38: #{attention_module.1} parent=35 // pred_check_branch
        %2520 = sbr.rel (%p2518) target = $region40
      $region39: #{attention_module.1} parent=35 // pred_region
        %s2521 = smul.u32 4, %s17
      $region40: #{attention_module.1} parent=35 // pred_fallthru
        _
      // Predicated region
      $region41: #{attention_module.1} parent=35 // pred_check
        %p2522 = pneg %p150
      $region42: #{attention_module.1} parent=35 // pred_check_branch
        %2524 = sbr.rel (%p2522) target = $region44
      $region43: #{attention_module.1} parent=35 // pred_region
        %s2525 = smul.u32 4, %s17
      $region44: #{attention_module.1} parent=35 // pred_fallthru
        _
    $region36: #{attention_module.1} parent=5 // pred_fallthru
      _
    %p2526 = scmp.le.s32.totalorder 2, %s12
    // Predicated region
    $region45: #{attention_module.1} parent=5 // pred_check
      %p2527 = pneg %p2526
    $region46: #{attention_module.1} parent=5 // pred_check_branch
      %2529 = sbr.rel (%p2527) target = $region48
    $region47: #{attention_module.1} parent=5 // pred_region
      %s2530 = ssub.s32 %s12, 2
      // Predicated region
      $region49: #{attention_module.1} parent=47 // pred_check
        %p2531 = pneg %p130
      $region50: #{attention_module.1} parent=47 // pred_check_branch
        %2533 = sbr.rel (%p2531) target = $region52
      $region51: #{attention_module.1} parent=47 // pred_region
        %s2534 = smul.u32 4, %s18
        %p2535 = scmp.lt.s32.totalorder %s2534, 7
        %s2536 = scalar_select %p2535, %s2534, 7
        %s2537 = smul.addr %s2536, 24
        %s2538 = smul.addr %s2537, 8
        %s2539 = scalar_lea.vmem %s4, %s2538
      $region52: #{attention_module.1} parent=47 // pred_fallthru
        _
      // Predicated region
      $region53: #{attention_module.1} parent=47 // pred_check
        %p2540 = pneg %p156
      $region54: #{attention_module.1} parent=47 // pred_check_branch
        %2542 = sbr.rel (%p2540) target = $region56
      $region55: #{attention_module.1} parent=47 // pred_region
        %s2543 = smul.u32 4, %s18
        %p2544 = scmp.lt.s32.totalorder %s2543, 7
        %s2545 = scalar_select %p2544, %s2543, 7
        %s2546 = smul.addr %s2545, 12
        %s2547 = smul.addr %s2546, 8
        %s2548 = scalar_lea.vmem %s5, %s2547
      $region56: #{attention_module.1} parent=47 // pred_fallthru
        _
    $region48: #{attention_module.1} parent=5 // pred_fallthru
      _
  $region6: #{attention_module.1} parent=0 // loop_footer
    %s16 = sadd.s32 1, %s12
  $region7: #{attention_module.1} parent=0 // loop_footer_branch
    %11 = sbr.rel target = $region3
  $region8: #{attention_module.1} parent=0 // loop_exit
    _

</llo_original>
